<compile_context>
chip_gen: v6e
topology: v6e:2x2x1
jax: 0.10.0
libtpu: 0.0.40
codegen_flags: <defaults>
</compile_context>

<pallas_src>
import functools

import jax
import jax.numpy as jnp
import numpy as np
from jax.experimental import pallas as pl
from jax.experimental.pallas import tpu as pltpu

BN_MOMENTUM = 0.1  # unused at inference; kept for parity with the module
BN_EPS = 1e-5


def _root_kernel(*refs, n_children, residual, nb):
    """refs = (x_0 .. x_{k-1}, w_0 .. w_{k-1}, bias, out, acc).

    x_i : (nb, Ci, t)    activation tile of child i (NCHW-native, HW-major)
    w_i : (Cout, Ci)     BN-scale-folded weight slice (activation dtype)
    bias: (Cout, 128)    folded BN bias, replicated across lanes (f32)
    out : (nb, Cout, t)  output tile (lane-dense last dim)
    acc : (Cout, t)      f32 VMEM accumulator scratch
    """
    xs = refs[:n_children]
    ws = refs[n_children:2 * n_children]
    bias_ref = refs[2 * n_children]
    o_ref = refs[2 * n_children + 1]
    acc_ref = refs[2 * n_children + 2]

    # Unmasked full-width load; lane-0 column broadcasts against (Cout, t).
    bias = bias_ref[...][:, 0:1]

    for b in range(nb):  # static, small unrolled batch-fold loop
        # 1x1 conv over the concatenated channel axis == sum of per-child
        # matmuls, accumulated in the f32 VMEM scratch (MRB-friendly on v7x).
        acc_ref[...] = jnp.dot(ws[0][...], xs[0][b],
                               preferred_element_type=jnp.float32)
        for i in range(1, n_children):
            acc_ref[...] += jnp.dot(ws[i][...], xs[i][b],
                                    preferred_element_type=jnp.float32)
        y = acc_ref[...] + bias                       # folded BN bias (f32)
        if residual:                                  # static flag; reuse child-0 tile
            y = y + xs[0][b].astype(jnp.float32)
        o_ref[b] = jnp.maximum(y, 0.0).astype(o_ref.dtype)


def _pick_spatial_tile(hw, t_cap):
    """Largest divisor of hw that is a multiple of 128 and <= t_cap; else hw."""
    if hw % 128 == 0:
        q_max = max(1, min(hw // 128, t_cap // 128))
        for q in range(q_max, 0, -1):
            if (hw // 128) % q == 0:
                return 128 * q
    # Ragged / small HW: a full-extent last dim is always a legal block.
    return hw


def _largest_divisor_leq(n, cap):
    cap = max(1, min(n, cap))
    for d in range(cap, 0, -1):
        if n % d == 0:
            return d
    return 1


def root_forward(children, weight, gamma, beta, running_mean, running_var,
                 *, residual, t_max=None):
    """children: tuple of NCHW arrays; weight: (Cout, Cin, 1, 1)."""
    children = tuple(children)
    n_children = len(children)
    N, _, H, W = children[0].shape
    child_channels = [int(c.shape[1]) for c in children]
    Cin = sum(child_channels)
    Cout = int(weight.shape[0])
    assert weight.shape[1] == Cin
    if residual:
        assert child_channels[0] == Cout, \
            "residual requires children[0] channels == out_channels"

    HW = H * W
    x_dtype = children[0].dtype
    itemsize = jnp.dtype(x_dtype).itemsize

    # ---- per-generation knobs --------------------------------------------
    kind = jax.devices()[0].device_kind.lower()
    is_v7 = ("v7" in kind) or ("7x" in kind)
    if is_v7:
        t_cap = 512 if t_max is None else int(t_max)
        vmem_budget = 52 * 1024 * 1024          # headroom inside 64 MiB VMEM
    else:
        t_cap = 1024 if t_max is None else int(t_max)
        vmem_budget = 100 * 1024 * 1024         # 128 MiB physical on v5e/v6e
        if "v2" in kind or "v3" in kind:
            vmem_budget = 12 * 1024 * 1024
    if t_max is None and Cin <= 128 and Cout <= 128:
        t_cap *= 2                               # small-channel roots: bigger tiles
    try:
        phys = int(pltpu.get_tpu_info().vmem_capacity_bytes)
        vmem_budget = min(vmem_budget, int(phys * 0.8))
    except Exception:
        pass

    # ---- spatial tile & batch fold (no HBM padding, no output re-slice) ---
    t = _pick_spatial_tile(HW, t_cap)
    n_hw_blocks = HW // t

    nb = 1
    if HW <= 256 and N > 1:
        # Fold batches so each grid step moves a reasonably large slab,
        # amortizing the ~0.35us per-step overhead.
        nb = _largest_divisor_leq(N, max(1, 1024 // max(HW, 1)))
    if is_v7 and nb > 1 and (N // nb) * n_hw_blocks < 2:
        # Keep >=2 parallel steps so both v7x TensorCores get work.
        nb = _largest_divisor_leq(N, max(1, N // 2))

    def working_set_bytes(nb_, t_):
        tiles = 2 * nb_ * t_ * (Cin + Cout) * itemsize      # double-buffered I/O
        weights = 2 * (Cout * Cin * itemsize + Cout * 128 * 4)
        scratch = Cout * t_ * 4
        return tiles + weights + scratch

    # Shrink (nb first, then t) rather than silently over-committing VMEM.
    while working_set_bytes(nb, t) > 0.8 * vmem_budget:
        if nb > 1:
            nb = _largest_divisor_leq(N, nb - 1)
        elif t % 256 == 0:
            t //= 2
        else:
            break   # TODO(synk): huge ragged H*W would need a masked tail tile
    n_hw_blocks = HW // t

    # ---- operand prep ------------------------------------------------------
    # NCHW -> (N, Ci, HW) is a free view (no transpose, no pad).
    x_flats = [c.reshape(N, c.shape[1], HW) for c in children]

    # Fold BN: scale = gamma / sqrt(var + eps) into the weight (f32 fold, then
    # cast to the activation dtype for native MXU passes); keep only the bias
    # for the kernel epilogue, replicated across 128 lanes.
    scale = (gamma.astype(jnp.float32)
             / jnp.sqrt(running_var.astype(jnp.float32) + BN_EPS))       # (Cout,)
    bias = (beta.astype(jnp.float32)
            - running_mean.astype(jnp.float32) * scale)                  # (Cout,)
    bias2d = jnp.tile(bias.reshape(Cout, 1), (1, 128))

    w2d = weight.reshape(Cout, Cin).astype(jnp.float32) * scale[:, None]
    w_slices = []
    off = 0
    for ci in child_channels:
        w_slices.append(w2d[:, off:off + ci].astype(x_dtype))
        off += ci

    grid = (N // nb, n_hw_blocks)
    kernel = functools.partial(_root_kernel, n_children=n_children,
                               residual=residual, nb=nb)

    def build_call(single_buffer_consts):
        if single_buffer_consts:
            def const_spec(shape):
                # Constant block index -> one VMEM copy is enough.
                return pl.BlockSpec(shape, lambda n, j: (0, 0),
                                    pipeline_mode=pl.Buffered(1))
        else:
            def const_spec(shape):
                return pl.BlockSpec(shape, lambda n, j: (0, 0))

        in_specs = []
        for ci in child_channels:     # child activation tiles
            in_specs.append(pl.BlockSpec((nb, ci, t), lambda n, j: (n, 0, j)))
        for ci in child_channels:     # resident, constant-index weight slices
            in_specs.append(const_spec((Cout, ci)))
        in_specs.append(const_spec((Cout, 128)))   # folded BN bias

        out_spec = pl.BlockSpec((nb, Cout, t), lambda n, j: (n, 0, j))

        return pl.pallas_call(
            kernel,
            out_shape=jax.ShapeDtypeStruct((N, Cout, HW), x_dtype),
            grid_spec=pltpu.PrefetchScalarGridSpec(
                num_scalar_prefetch=0,
                grid=grid,
                in_specs=in_specs,
                out_specs=out_spec,
                scratch_shapes=[pltpu.VMEM((Cout, t), jnp.float32)],
            ),
            compiler_params=pltpu.CompilerParams(
                dimension_semantics=("parallel", "parallel"),
                vmem_limit_bytes=int(vmem_budget)),
        )

    try:   # prefer single-buffered constants; fall back if unsupported
        out_flat = build_call(True)(*x_flats, *w_slices, bias2d)
    except Exception:
        out_flat = build_call(False)(*x_flats, *w_slices, bias2d)

    return out_flat.reshape(N, Cout, H, W)


def root_reference(children, weight, gamma, beta, running_mean, running_var, *, residual):
    """Pure-JAX reference mirroring the PyTorch forward (eval-mode BN)."""
    x = jnp.concatenate([c.astype(jnp.float32) for c in children], axis=1)
    Cout, Cin = weight.shape[0], weight.shape[1]
    y = jnp.einsum('nchw,oc->nohw', x, weight.reshape(Cout, Cin).astype(jnp.float32))
    scale = gamma / jnp.sqrt(running_var + BN_EPS)
    bias = beta - running_mean * scale
    y = y * scale[None, :, None, None] + bias[None, :, None, None]
    if residual:
        y = y + children[0].astype(jnp.float32)
    return jnp.maximum(y, 0.0)


if __name__ == "__main__":
    key = jax.random.PRNGKey(0)
    k1, k2, k3, k4, k5, k6, k7 = jax.random.split(key, 7)

    # Root(in_channels=C1+C2, out_channels=C1, kernel_size=1, residual=True)
    N, H, W = 2, 16, 16
    C1, C2 = 32, 32
    Cin, Cout = C1 + C2, C1

    x1 = jax.random.normal(k1, (N, C1, H, W), dtype=jnp.float32)
    x2 = jax.random.normal(k2, (N, C2, H, W), dtype=jnp.float32)

    weight = jax.random.normal(k3, (Cout, Cin, 1, 1), dtype=jnp.float32) * 0.1
    gamma = 1.0 + 0.1 * jax.random.normal(k4, (Cout,), dtype=jnp.float32)
    beta = 0.1 * jax.random.normal(k5, (Cout,), dtype=jnp.float32)
    running_mean = 0.1 * jax.random.normal(k6, (Cout,), dtype=jnp.float32)
    running_var = jnp.abs(1.0 + 0.1 * jax.random.normal(k7, (Cout,), dtype=jnp.float32))

    # f32 path, residual=True
    out = root_forward((x1, x2), weight, gamma, beta, running_mean, running_var,
                       residual=True)
    out = jax.block_until_ready(out)
    ref = root_reference((x1, x2), weight, gamma, beta, running_mean, running_var,
                         residual=True)
    np.testing.assert_allclose(np.asarray(out), np.asarray(ref), rtol=1e-5, atol=1e-5)

    # f32 path, residual=False (no extra operand is DMA'd at all)
    out_nr = root_forward((x1, x2), weight, gamma, beta, running_mean, running_var,
                          residual=False)
    out_nr = jax.block_until_ready(out_nr)
    ref_nr = root_reference((x1, x2), weight, gamma, beta, running_mean, running_var,
                            residual=False)
    np.testing.assert_allclose(np.asarray(out_nr), np.asarray(ref_nr), rtol=1e-5, atol=1e-5)

    # bf16 activations: BN-folded weights are cast to bf16 -> native MXU passes.
    x1b, x2b = x1.astype(jnp.bfloat16), x2.astype(jnp.bfloat16)
    out_bf = root_forward((x1b, x2b), weight, gamma, beta, running_mean, running_var,
                          residual=True)
    out_bf = jax.block_until_ready(out_bf)
    ref_bf = root_reference((x1b, x2b), weight, gamma, beta, running_mean, running_var,
                            residual=True)
    np.testing.assert_allclose(np.asarray(out_bf.astype(jnp.float32)),
                               np.asarray(ref_bf.astype(jnp.float32)),
                               rtol=1e-1, atol=1e-1)

    print("KERNEL_OK")
</pallas_src>

<mosaic_0001>
module attributes {stable_mosaic.version = 11 : i64} {
  func.func @_root_kernel(%arg0: i32, %arg1: i32, %arg2: memref<2x32x256xf32, #tpu.memory_space<vmem>>, %arg3: memref<2x32x256xf32, #tpu.memory_space<vmem>>, %arg4: memref<32x32xf32, #tpu.memory_space<vmem>>, %arg5: memref<32x32xf32, #tpu.memory_space<vmem>>, %arg6: memref<32x128xf32, #tpu.memory_space<vmem>>, %arg7: memref<2x32x256xf32, #tpu.memory_space<vmem>>, %arg8: memref<32x256xf32, #tpu.memory_space<vmem>>) attributes {dimension_semantics = [#tpu.dimension_semantics<parallel>, #tpu.dimension_semantics<parallel>], iteration_bounds = array<i64: 1, 1>, scalar_prefetch = 0 : i64, scratch_operands = 1 : i64, tpu.core_type = #tpu.core_type<tc>, window_params = [{transform_indices = @transform_0, window_bounds = array<i64: 2, 32, 256>}, {transform_indices = @transform_1, window_bounds = array<i64: 2, 32, 256>}, {pipeline_mode = #tpu.pipeline_mode<synchronous>, transform_indices = @transform_2, window_bounds = array<i64: 32, 32>}, {pipeline_mode = #tpu.pipeline_mode<synchronous>, transform_indices = @transform_3, window_bounds = array<i64: 32, 32>}, {pipeline_mode = #tpu.pipeline_mode<synchronous>, transform_indices = @transform_4, window_bounds = array<i64: 32, 128>}, {transform_indices = @transform_5, window_bounds = array<i64: 2, 32, 256>}]} {
    %c0 = arith.constant 0 : index
    %c0_0 = arith.constant 0 : index
    %0 = vector.load %arg6[%c0, %c0_0] : memref<32x128xf32, #tpu.memory_space<vmem>>, vector<32x128xf32>
    %1 = vector.extract_strided_slice %0 {offsets = [0, 0], sizes = [32, 1], strides = [1, 1]} : vector<32x128xf32> to vector<32x1xf32>
    %c0_1 = arith.constant 0 : index
    %c0_2 = arith.constant 0 : index
    %2 = vector.load %arg4[%c0_1, %c0_2] : memref<32x32xf32, #tpu.memory_space<vmem>>, vector<32x32xf32>
    %c0_3 = arith.constant 0 : index
    %c0_4 = arith.constant 0 : index
    %c0_5 = arith.constant 0 : index
    %3 = vector.load %arg2[%c0_3, %c0_4, %c0_5] : memref<2x32x256xf32, #tpu.memory_space<vmem>>, vector<1x32x256xf32>
    %4 = vector.shape_cast %3 : vector<1x32x256xf32> to vector<32x256xf32>
    %cst = arith.constant dense<0.000000e+00> : vector<32x256xf32>
    %5 = tpu.matmul %2, %4, %cst {dimension_numbers = #tpu.dot_dimension_numbers<[1], [0], [0], [1], [0, 0, 1, 1], [], []>} : vector<32x32xf32>, vector<32x256xf32>, vector<32x256xf32> -> vector<32x256xf32>
    %c0_6 = arith.constant 0 : index
    %c0_7 = arith.constant 0 : index
    %6 = vector.load %arg8[%c0_6, %c0_7] : memref<32x256xf32, #tpu.memory_space<vmem>>, vector<32x256xf32>
    tpu.vector_store %arg8[%c0_6, %c0_7], %5 {strides = array<i32>} : memref<32x256xf32, #tpu.memory_space<vmem>>, vector<32x256xf32>,
    %c0_8 = arith.constant 0 : index
    %c0_9 = arith.constant 0 : index
    %7 = vector.load %arg8[%c0_8, %c0_9] : memref<32x256xf32, #tpu.memory_space<vmem>>, vector<32x256xf32>
    %c0_10 = arith.constant 0 : index
    %c0_11 = arith.constant 0 : index
    %8 = vector.load %arg5[%c0_10, %c0_11] : memref<32x32xf32, #tpu.memory_space<vmem>>, vector<32x32xf32>
    %c0_12 = arith.constant 0 : index
    %c0_13 = arith.constant 0 : index
    %c0_14 = arith.constant 0 : index
    %9 = vector.load %arg3[%c0_12, %c0_13, %c0_14] : memref<2x32x256xf32, #tpu.memory_space<vmem>>, vector<1x32x256xf32>
    %10 = vector.shape_cast %9 : vector<1x32x256xf32> to vector<32x256xf32>
    %cst_15 = arith.constant dense<0.000000e+00> : vector<32x256xf32>
    %11 = tpu.matmul %8, %10, %cst_15 {dimension_numbers = #tpu.dot_dimension_numbers<[1], [0], [0], [1], [0, 0, 1, 1], [], []>} : vector<32x32xf32>, vector<32x256xf32>, vector<32x256xf32> -> vector<32x256xf32>
    %12 = arith.addf %7, %11 : vector<32x256xf32>
    %c0_16 = arith.constant 0 : index
    %c0_17 = arith.constant 0 : index
    %13 = vector.load %arg8[%c0_16, %c0_17] : memref<32x256xf32, #tpu.memory_space<vmem>>, vector<32x256xf32>
    tpu.vector_store %arg8[%c0_16, %c0_17], %12 {strides = array<i32>} : memref<32x256xf32, #tpu.memory_space<vmem>>, vector<32x256xf32>,
    %c0_18 = arith.constant 0 : index
    %c0_19 = arith.constant 0 : index
    %14 = vector.load %arg8[%c0_18, %c0_19] : memref<32x256xf32, #tpu.memory_space<vmem>>, vector<32x256xf32>
    %15 = vector.broadcast %1 : vector<32x1xf32> to vector<32x256xf32>
    %16 = arith.addf %14, %15 : vector<32x256xf32>
    %c0_20 = arith.constant 0 : index
    %c0_21 = arith.constant 0 : index
    %c0_22 = arith.constant 0 : index
    %17 = vector.load %arg2[%c0_20, %c0_21, %c0_22] : memref<2x32x256xf32, #tpu.memory_space<vmem>>, vector<1x32x256xf32>
    %18 = vector.shape_cast %17 : vector<1x32x256xf32> to vector<32x256xf32>
    %19 = arith.addf %16, %18 : vector<32x256xf32>
    %cst_23 = arith.constant 0.000000e+00 : f32
    %20 = vector.broadcast %cst_23 : f32 to vector<32x256xf32>
    %21 = arith.maximumf %19, %20 : vector<32x256xf32>
    %c0_24 = arith.constant 0 : index
    %c0_25 = arith.constant 0 : index
    %c0_26 = arith.constant 0 : index
    %22 = vector.load %arg7[%c0_24, %c0_25, %c0_26] : memref<2x32x256xf32, #tpu.memory_space<vmem>>, vector<1x32x256xf32>
    %23 = vector.shape_cast %22 : vector<1x32x256xf32> to vector<32x256xf32>
    %24 = vector.shape_cast %21 : vector<32x256xf32> to vector<1x32x256xf32>
    tpu.vector_store %arg7[%c0_24, %c0_25, %c0_26], %24 {strides = array<i32>} : memref<2x32x256xf32, #tpu.memory_space<vmem>>, vector<1x32x256xf32>,
    %c0_27 = arith.constant 0 : index
    %c0_28 = arith.constant 0 : index
    %25 = vector.load %arg4[%c0_27, %c0_28] : memref<32x32xf32, #tpu.memory_space<vmem>>, vector<32x32xf32>
    %c1 = arith.constant 1 : index
    %c0_29 = arith.constant 0 : index
    %c0_30 = arith.constant 0 : index
    %26 = vector.load %arg2[%c1, %c0_29, %c0_30] : memref<2x32x256xf32, #tpu.memory_space<vmem>>, vector<1x32x256xf32>
    %27 = vector.shape_cast %26 : vector<1x32x256xf32> to vector<32x256xf32>
    %cst_31 = arith.constant dense<0.000000e+00> : vector<32x256xf32>
    %28 = tpu.matmul %25, %27, %cst_31 {dimension_numbers = #tpu.dot_dimension_numbers<[1], [0], [0], [1], [0, 0, 1, 1], [], []>} : vector<32x32xf32>, vector<32x256xf32>, vector<32x256xf32> -> vector<32x256xf32>
    %c0_32 = arith.constant 0 : index
    %c0_33 = arith.constant 0 : index
    %29 = vector.load %arg8[%c0_32, %c0_33] : memref<32x256xf32, #tpu.memory_space<vmem>>, vector<32x256xf32>
    tpu.vector_store %arg8[%c0_32, %c0_33], %28 {strides = array<i32>} : memref<32x256xf32, #tpu.memory_space<vmem>>, vector<32x256xf32>,
    %c0_34 = arith.constant 0 : index
    %c0_35 = arith.constant 0 : index
    %30 = vector.load %arg8[%c0_34, %c0_35] : memref<32x256xf32, #tpu.memory_space<vmem>>, vector<32x256xf32>
    %c0_36 = arith.constant 0 : index
    %c0_37 = arith.constant 0 : index
    %31 = vector.load %arg5[%c0_36, %c0_37] : memref<32x32xf32, #tpu.memory_space<vmem>>, vector<32x32xf32>
    %c1_38 = arith.constant 1 : index
    %c0_39 = arith.constant 0 : index
    %c0_40 = arith.constant 0 : index
    %32 = vector.load %arg3[%c1_38, %c0_39, %c0_40] : memref<2x32x256xf32, #tpu.memory_space<vmem>>, vector<1x32x256xf32>
    %33 = vector.shape_cast %32 : vector<1x32x256xf32> to vector<32x256xf32>
    %cst_41 = arith.constant dense<0.000000e+00> : vector<32x256xf32>
    %34 = tpu.matmul %31, %33, %cst_41 {dimension_numbers = #tpu.dot_dimension_numbers<[1], [0], [0], [1], [0, 0, 1, 1], [], []>} : vector<32x32xf32>, vector<32x256xf32>, vector<32x256xf32> -> vector<32x256xf32>
    %35 = arith.addf %30, %34 : vector<32x256xf32>
    %c0_42 = arith.constant 0 : index
    %c0_43 = arith.constant 0 : index
    %36 = vector.load %arg8[%c0_42, %c0_43] : memref<32x256xf32, #tpu.memory_space<vmem>>, vector<32x256xf32>
    tpu.vector_store %arg8[%c0_42, %c0_43], %35 {strides = array<i32>} : memref<32x256xf32, #tpu.memory_space<vmem>>, vector<32x256xf32>,
    %c0_44 = arith.constant 0 : index
    %c0_45 = arith.constant 0 : index
    %37 = vector.load %arg8[%c0_44, %c0_45] : memref<32x256xf32, #tpu.memory_space<vmem>>, vector<32x256xf32>
    %38 = vector.broadcast %1 : vector<32x1xf32> to vector<32x256xf32>
    %39 = arith.addf %37, %38 : vector<32x256xf32>
    %c1_46 = arith.constant 1 : index
    %c0_47 = arith.constant 0 : index
    %c0_48 = arith.constant 0 : index
    %40 = vector.load %arg2[%c1_46, %c0_47, %c0_48] : memref<2x32x256xf32, #tpu.memory_space<vmem>>, vector<1x32x256xf32>
    %41 = vector.shape_cast %40 : vector<1x32x256xf32> to vector<32x256xf32>
    %42 = arith.addf %39, %41 : vector<32x256xf32>
    %cst_49 = arith.constant 0.000000e+00 : f32
    %43 = vector.broadcast %cst_49 : f32 to vector<32x256xf32>
    %44 = arith.maximumf %42, %43 : vector<32x256xf32>
    %c1_50 = arith.constant 1 : index
    %c0_51 = arith.constant 0 : index
    %c0_52 = arith.constant 0 : index
    %45 = vector.load %arg7[%c1_50, %c0_51, %c0_52] : memref<2x32x256xf32, #tpu.memory_space<vmem>>, vector<1x32x256xf32>
    %46 = vector.shape_cast %45 : vector<1x32x256xf32> to vector<32x256xf32>
    %47 = vector.shape_cast %44 : vector<32x256xf32> to vector<1x32x256xf32>
    tpu.vector_store %arg7[%c1_50, %c0_51, %c0_52], %47 {strides = array<i32>} : memref<2x32x256xf32, #tpu.memory_space<vmem>>, vector<1x32x256xf32>,
    return
  }
  func.func @transform_0(%arg0: i32, %arg1: i32) -> (i32, i32, i32) {
    %c0_i32 = arith.constant 0 : i32
    %c0_i32_0 = arith.constant 0 : i32
    return %arg0, %c0_i32, %arg1 : i32, i32, i32
  }
  func.func @transform_1(%arg0: i32, %arg1: i32) -> (i32, i32, i32) {
    %c0_i32 = arith.constant 0 : i32
    %c0_i32_0 = arith.constant 0 : i32
    return %arg0, %c0_i32, %arg1 : i32, i32, i32
  }
  func.func @transform_2(%arg0: i32, %arg1: i32) -> (i32, i32) {
    %c0_i32 = arith.constant 0 : i32
    %c0_i32_0 = arith.constant 0 : i32
    %c0_i32_1 = arith.constant 0 : i32
    return %c0_i32, %c0_i32_0 : i32, i32
  }
  func.func @transform_3(%arg0: i32, %arg1: i32) -> (i32, i32) {
    %c0_i32 = arith.constant 0 : i32
    %c0_i32_0 = arith.constant 0 : i32
    %c0_i32_1 = arith.constant 0 : i32
    return %c0_i32, %c0_i32_0 : i32, i32
  }
  func.func @transform_4(%arg0: i32, %arg1: i32) -> (i32, i32) {
    %c0_i32 = arith.constant 0 : i32
    %c0_i32_0 = arith.constant 0 : i32
    %c0_i32_1 = arith.constant 0 : i32
    return %c0_i32, %c0_i32_0 : i32, i32
  }
  func.func @transform_5(%arg0: i32, %arg1: i32) -> (i32, i32, i32) {
    %c0_i32 = arith.constant 0 : i32
    %c0_i32_0 = arith.constant 0 : i32
    return %arg0, %c0_i32, %arg1 : i32, i32, i32
  }
}

module attributes {stable_mosaic.version = 11 : i64} {
  func.func @_root_kernel(%arg0: i32, %arg1: i32, %arg2: memref<2x32x256xf32, #tpu.memory_space<vmem>>, %arg3: memref<2x32x256xf32, #tpu.memory_space<vmem>>, %arg4: memref<32x32xf32, #tpu.memory_space<vmem>>, %arg5: memref<32x32xf32, #tpu.memory_space<vmem>>, %arg6: memref<32x128xf32, #tpu.memory_space<vmem>>, %arg7: memref<2x32x256xf32, #tpu.memory_space<vmem>>, %arg8: memref<32x256xf32, #tpu.memory_space<vmem>>) attributes {dimension_semantics = [#tpu.dimension_semantics<parallel>, #tpu.dimension_semantics<parallel>], iteration_bounds = array<i64: 1, 1>, scalar_prefetch = 0 : i64, scratch_operands = 1 : i64, tpu.core_type = #tpu.core_type<tc>, window_params = [{transform_indices = @transform_0, window_bounds = array<i64: 2, 32, 256>}, {transform_indices = @transform_1, window_bounds = array<i64: 2, 32, 256>}, {pipeline_mode = #tpu.pipeline_mode<synchronous>, transform_indices = @transform_2, window_bounds = array<i64: 32, 32>}, {pipeline_mode = #tpu.pipeline_mode<synchronous>, transform_indices = @transform_3, window_bounds = array<i64: 32, 32>}, {pipeline_mode = #tpu.pipeline_mode<synchronous>, transform_indices = @transform_4, window_bounds = array<i64: 32, 128>}, {transform_indices = @transform_5, window_bounds = array<i64: 2, 32, 256>}]} {
    %c0 = arith.constant 0 : index
    %c0_0 = arith.constant 0 : index
    %0 = vector.load %arg6[%c0, %c0_0] : memref<32x128xf32, #tpu.memory_space<vmem>>, vector<32x128xf32>
    %1 = vector.extract_strided_slice %0 {offsets = [0, 0], sizes = [32, 1], strides = [1, 1]} : vector<32x128xf32> to vector<32x1xf32>
    %c0_1 = arith.constant 0 : index
    %c0_2 = arith.constant 0 : index
    %2 = vector.load %arg4[%c0_1, %c0_2] : memref<32x32xf32, #tpu.memory_space<vmem>>, vector<32x32xf32>
    %c0_3 = arith.constant 0 : index
    %c0_4 = arith.constant 0 : index
    %c0_5 = arith.constant 0 : index
    %3 = vector.load %arg2[%c0_3, %c0_4, %c0_5] : memref<2x32x256xf32, #tpu.memory_space<vmem>>, vector<1x32x256xf32>
    %4 = vector.shape_cast %3 : vector<1x32x256xf32> to vector<32x256xf32>
    %cst = arith.constant dense<0.000000e+00> : vector<32x256xf32>
    %5 = tpu.matmul %2, %4, %cst {dimension_numbers = #tpu.dot_dimension_numbers<[1], [0], [0], [1], [0, 0, 1, 1], [], []>} : vector<32x32xf32>, vector<32x256xf32>, vector<32x256xf32> -> vector<32x256xf32>
    %c0_6 = arith.constant 0 : index
    %c0_7 = arith.constant 0 : index
    %6 = vector.load %arg8[%c0_6, %c0_7] : memref<32x256xf32, #tpu.memory_space<vmem>>, vector<32x256xf32>
    tpu.vector_store %arg8[%c0_6, %c0_7], %5 {strides = array<i32>} : memref<32x256xf32, #tpu.memory_space<vmem>>, vector<32x256xf32>,
    %c0_8 = arith.constant 0 : index
    %c0_9 = arith.constant 0 : index
    %7 = vector.load %arg8[%c0_8, %c0_9] : memref<32x256xf32, #tpu.memory_space<vmem>>, vector<32x256xf32>
    %c0_10 = arith.constant 0 : index
    %c0_11 = arith.constant 0 : index
    %8 = vector.load %arg5[%c0_10, %c0_11] : memref<32x32xf32, #tpu.memory_space<vmem>>, vector<32x32xf32>
    %c0_12 = arith.constant 0 : index
    %c0_13 = arith.constant 0 : index
    %c0_14 = arith.constant 0 : index
    %9 = vector.load %arg3[%c0_12, %c0_13, %c0_14] : memref<2x32x256xf32, #tpu.memory_space<vmem>>, vector<1x32x256xf32>
    %10 = vector.shape_cast %9 : vector<1x32x256xf32> to vector<32x256xf32>
    %cst_15 = arith.constant dense<0.000000e+00> : vector<32x256xf32>
    %11 = tpu.matmul %8, %10, %cst_15 {dimension_numbers = #tpu.dot_dimension_numbers<[1], [0], [0], [1], [0, 0, 1, 1], [], []>} : vector<32x32xf32>, vector<32x256xf32>, vector<32x256xf32> -> vector<32x256xf32>
    %12 = arith.addf %7, %11 : vector<32x256xf32>
    %c0_16 = arith.constant 0 : index
    %c0_17 = arith.constant 0 : index
    %13 = vector.load %arg8[%c0_16, %c0_17] : memref<32x256xf32, #tpu.memory_space<vmem>>, vector<32x256xf32>
    tpu.vector_store %arg8[%c0_16, %c0_17], %12 {strides = array<i32>} : memref<32x256xf32, #tpu.memory_space<vmem>>, vector<32x256xf32>,
    %c0_18 = arith.constant 0 : index
    %c0_19 = arith.constant 0 : index
    %14 = vector.load %arg8[%c0_18, %c0_19] : memref<32x256xf32, #tpu.memory_space<vmem>>, vector<32x256xf32>
    %15 = vector.broadcast %1 : vector<32x1xf32> to vector<32x256xf32>
    %16 = arith.addf %14, %15 : vector<32x256xf32>
    %c0_20 = arith.constant 0 : index
    %c0_21 = arith.constant 0 : index
    %c0_22 = arith.constant 0 : index
    %17 = vector.load %arg2[%c0_20, %c0_21, %c0_22] : memref<2x32x256xf32, #tpu.memory_space<vmem>>, vector<1x32x256xf32>
    %18 = vector.shape_cast %17 : vector<1x32x256xf32> to vector<32x256xf32>
    %19 = arith.addf %16, %18 : vector<32x256xf32>
    %cst_23 = arith.constant 0.000000e+00 : f32
    %20 = vector.broadcast %cst_23 : f32 to vector<32x256xf32>
    %21 = arith.maximumf %19, %20 : vector<32x256xf32>
    %c0_24 = arith.constant 0 : index
    %c0_25 = arith.constant 0 : index
    %c0_26 = arith.constant 0 : index
    %22 = vector.load %arg7[%c0_24, %c0_25, %c0_26] : memref<2x32x256xf32, #tpu.memory_space<vmem>>, vector<1x32x256xf32>
    %23 = vector.shape_cast %22 : vector<1x32x256xf32> to vector<32x256xf32>
    %24 = vector.shape_cast %21 : vector<32x256xf32> to vector<1x32x256xf32>
    tpu.vector_store %arg7[%c0_24, %c0_25, %c0_26], %24 {strides = array<i32>} : memref<2x32x256xf32, #tpu.memory_space<vmem>>, vector<1x32x256xf32>,
    %c0_27 = arith.constant 0 : index
    %c0_28 = arith.constant 0 : index
    %25 = vector.load %arg4[%c0_27, %c0_28] : memref<32x32xf32, #tpu.memory_space<vmem>>, vector<32x32xf32>
    %c1 = arith.constant 1 : index
    %c0_29 = arith.constant 0 : index
    %c0_30 = arith.constant 0 : index
    %26 = vector.load %arg2[%c1, %c0_29, %c0_30] : memref<2x32x256xf32, #tpu.memory_space<vmem>>, vector<1x32x256xf32>
    %27 = vector.shape_cast %26 : vector<1x32x256xf32> to vector<32x256xf32>
    %cst_31 = arith.constant dense<0.000000e+00> : vector<32x256xf32>
    %28 = tpu.matmul %25, %27, %cst_31 {dimension_numbers = #tpu.dot_dimension_numbers<[1], [0], [0], [1], [0, 0, 1, 1], [], []>} : vector<32x32xf32>, vector<32x256xf32>, vector<32x256xf32> -> vector<32x256xf32>
    %c0_32 = arith.constant 0 : index
    %c0_33 = arith.constant 0 : index
    %29 = vector.load %arg8[%c0_32, %c0_33] : memref<32x256xf32, #tpu.memory_space<vmem>>, vector<32x256xf32>
    tpu.vector_store %arg8[%c0_32, %c0_33], %28 {strides = array<i32>} : memref<32x256xf32, #tpu.memory_space<vmem>>, vector<32x256xf32>,
    %c0_34 = arith.constant 0 : index
    %c0_35 = arith.constant 0 : index
    %30 = vector.load %arg8[%c0_34, %c0_35] : memref<32x256xf32, #tpu.memory_space<vmem>>, vector<32x256xf32>
    %c0_36 = arith.constant 0 : index
    %c0_37 = arith.constant 0 : index
    %31 = vector.load %arg5[%c0_36, %c0_37] : memref<32x32xf32, #tpu.memory_space<vmem>>, vector<32x32xf32>
    %c1_38 = arith.constant 1 : index
    %c0_39 = arith.constant 0 : index
    %c0_40 = arith.constant 0 : index
    %32 = vector.load %arg3[%c1_38, %c0_39, %c0_40] : memref<2x32x256xf32, #tpu.memory_space<vmem>>, vector<1x32x256xf32>
    %33 = vector.shape_cast %32 : vector<1x32x256xf32> to vector<32x256xf32>
    %cst_41 = arith.constant dense<0.000000e+00> : vector<32x256xf32>
    %34 = tpu.matmul %31, %33, %cst_41 {dimension_numbers = #tpu.dot_dimension_numbers<[1], [0], [0], [1], [0, 0, 1, 1], [], []>} : vector<32x32xf32>, vector<32x256xf32>, vector<32x256xf32> -> vector<32x256xf32>
    %35 = arith.addf %30, %34 : vector<32x256xf32>
    %c0_42 = arith.constant 0 : index
    %c0_43 = arith.constant 0 : index
    %36 = vector.load %arg8[%c0_42, %c0_43] : memref<32x256xf32, #tpu.memory_space<vmem>>, vector<32x256xf32>
    tpu.vector_store %arg8[%c0_42, %c0_43], %35 {strides = array<i32>} : memref<32x256xf32, #tpu.memory_space<vmem>>, vector<32x256xf32>,
    %c0_44 = arith.constant 0 : index
    %c0_45 = arith.constant 0 : index
    %37 = vector.load %arg8[%c0_44, %c0_45] : memref<32x256xf32, #tpu.memory_space<vmem>>, vector<32x256xf32>
    %38 = vector.broadcast %1 : vector<32x1xf32> to vector<32x256xf32>
    %39 = arith.addf %37, %38 : vector<32x256xf32>
    %c1_46 = arith.constant 1 : index
    %c0_47 = arith.constant 0 : index
    %c0_48 = arith.constant 0 : index
    %40 = vector.load %arg2[%c1_46, %c0_47, %c0_48] : memref<2x32x256xf32, #tpu.memory_space<vmem>>, vector<1x32x256xf32>
    %41 = vector.shape_cast %40 : vector<1x32x256xf32> to vector<32x256xf32>
    %42 = arith.addf %39, %41 : vector<32x256xf32>
    %cst_49 = arith.constant 0.000000e+00 : f32
    %43 = vector.broadcast %cst_49 : f32 to vector<32x256xf32>
    %44 = arith.maximumf %42, %43 : vector<32x256xf32>
    %c1_50 = arith.constant 1 : index
    %c0_51 = arith.constant 0 : index
    %c0_52 = arith.constant 0 : index
    %45 = vector.load %arg7[%c1_50, %c0_51, %c0_52] : memref<2x32x256xf32, #tpu.memory_space<vmem>>, vector<1x32x256xf32>
    %46 = vector.shape_cast %45 : vector<1x32x256xf32> to vector<32x256xf32>
    %47 = vector.shape_cast %44 : vector<32x256xf32> to vector<1x32x256xf32>
    tpu.vector_store %arg7[%c1_50, %c0_51, %c0_52], %47 {strides = array<i32>} : memref<2x32x256xf32, #tpu.memory_space<vmem>>, vector<1x32x256xf32>,
    return
  }
  func.func @transform_0(%arg0: i32, %arg1: i32) -> (i32, i32, i32) {
    %c0_i32 = arith.constant 0 : i32
    %c0_i32_0 = arith.constant 0 : i32
    return %arg0, %c0_i32, %arg1 : i32, i32, i32
  }
  func.func @transform_1(%arg0: i32, %arg1: i32) -> (i32, i32, i32) {
    %c0_i32 = arith.constant 0 : i32
    %c0_i32_0 = arith.constant 0 : i32
    return %arg0, %c0_i32, %arg1 : i32, i32, i32
  }
  func.func @transform_2(%arg0: i32, %arg1: i32) -> (i32, i32) {
    %c0_i32 = arith.constant 0 : i32
    %c0_i32_0 = arith.constant 0 : i32
    %c0_i32_1 = arith.constant 0 : i32
    return %c0_i32, %c0_i32_0 : i32, i32
  }
  func.func @transform_3(%arg0: i32, %arg1: i32) -> (i32, i32) {
    %c0_i32 = arith.constant 0 : i32
    %c0_i32_0 = arith.constant 0 : i32
    %c0_i32_1 = arith.constant 0 : i32
    return %c0_i32, %c0_i32_0 : i32, i32
  }
  func.func @transform_4(%arg0: i32, %arg1: i32) -> (i32, i32) {
    %c0_i32 = arith.constant 0 : i32
    %c0_i32_0 = arith.constant 0 : i32
    %c0_i32_1 = arith.constant 0 : i32
    return %c0_i32, %c0_i32_0 : i32, i32
  }
  func.func @transform_5(%arg0: i32, %arg1: i32) -> (i32, i32, i32) {
    %c0_i32 = arith.constant 0 : i32
    %c0_i32_0 = arith.constant 0 : i32
    return %arg0, %c0_i32, %arg1 : i32, i32, i32
  }
}

</mosaic_0001>

<llo_original>
// kernel: tpu_custom_call.1
$region0: #{tpu_custom_call.1}
  #allocation0 [shape = 'u32[]', space=smem, size = 0x4, offset = 0x4, fixed_abs, tag = 'smem constant byte address 0x4 - core index']
  #allocation1 [shape = 'u32[144,128]{1,0:T(1,128)}', space=vmem, size = 0x12000, scoped, tag = 'internal scratch']
  #allocation2 [shape = 'f32[32,256]{1,0:T(8,128)}', space=vmem, size = 0x8000, scoped, tag = 'scratch operand']
  %s0 = inlined_call_operand.hbm [shape: f32[2,32,256], index: 0, kind: input, shape index: {}]
  %s1 = inlined_call_operand.hbm [shape: f32[2,32,256], index: 1, kind: input, shape index: {}]
  %s2 = inlined_call_operand.hbm [shape: f32[32,32], index: 2, kind: input, shape index: {}]
  %s3 = inlined_call_operand.hbm [shape: f32[32,32], index: 3, kind: input, shape index: {}]
  %s4 = inlined_call_operand.hbm [shape: f32[32,128], index: 4, kind: input, shape index: {}]
  %s5 = inlined_call_operand.hbm [shape: f32[2,32,256], index: 5, kind: output, shape index: {}]
  %s6 = sld [smem:[#allocation0]]
  $region50: #{tpu_custom_call.1} parent=0
    _
  %s8 = ssub.s32 1, %s6
  %s9 = scalar_select 0, %s8, %s6
  $region1: #{tpu_custom_call.1} parent=0
    #allocation3 [shape = 'u8[65536]{0}', space=vmem, size = 0x10000, scoped, tag = 'input window, operand 0, single buffered']
    #allocation4 [shape = 's32[1]{0}', space=sflag, size = 0x4, scoped, tag = 'scoped memory for tpu_custom_call.1']
    #allocation5 [shape = 's32[1]{0}', space=sflag, size = 0x4, scoped, tag = 'scoped memory for tpu_custom_call.1']
    #allocation6 [shape = 'u8[65536]{0}', space=vmem, size = 0x10000, scoped, tag = 'input window, operand 1, single buffered']
    #allocation7 [shape = 's32[1]{0}', space=sflag, size = 0x4, scoped, tag = 'scoped memory for tpu_custom_call.1']
    #allocation8 [shape = 'u8[16384]{0}', space=vmem, size = 0x4000, scoped, tag = 'input window, operand 2, single buffered']
    #allocation9 [shape = 'u8[16384]{0}', space=vmem, size = 0x4000, scoped, tag = 'input window, operand 3, single buffered']
    #allocation10 [shape = 's32[1]{0}', space=sflag, size = 0x4, scoped, tag = 'scoped memory for tpu_custom_call.1']
    #allocation11 [shape = 'u8[16384]{0}', space=vmem, size = 0x4000, scoped, tag = 'input window, operand 4, single buffered']
    #allocation12 [shape = 'u8[65536]{0}', space=vmem, size = 0x10000, scoped, tag = 'output window, operand 0, single buffered']
    %10 = vsyncpa [#allocation4], 0
    %11 = vsyncpa [#allocation7], 0
    %12 = vsyncpa [#allocation10], 0
    %13 = vsyncpa [#allocation5], 0
    // Predicated region
    $region2: #{tpu_custom_call.1} parent=1 // pred_check
      _
    $region3: #{tpu_custom_call.1} parent=1 // pred_check_branch
      %15 = sbr.rel (0) target = $region5
    $region4: #{tpu_custom_call.1} parent=1 // pred_region
      %s17 = ssub.s32 2048, 2048
      %18 = vsyncadd [#allocation4], %s17
      %s19 = sshll.u32 [#allocation3], 4
      %s20 = int_to_ptr.vmem [resolvable:$true] %s19
      %25 = dma.hbm_to_vmem [thread:$0]  %s0, 2048, %s20, [#allocation4], 256, 256, 16
    $region5: #{tpu_custom_call.1} parent=1 // pred_fallthru
      _
    // Predicated region
    $region6: #{tpu_custom_call.1} parent=1 // pred_check
      _
    $region7: #{tpu_custom_call.1} parent=1 // pred_check_branch
      %27 = sbr.rel (0) target = $region9
    $region8: #{tpu_custom_call.1} parent=1 // pred_region
      %s29 = ssub.s32 2048, 2048
      %30 = vsyncadd [#allocation7], %s29
      %s31 = sshll.u32 [#allocation6], 4
      %s32 = int_to_ptr.vmem [resolvable:$true] %s31
      %37 = dma.hbm_to_vmem [thread:$0]  %s1, 2048, %s32, [#allocation7], 256, 256, 16
    $region9: #{tpu_custom_call.1} parent=1 // pred_fallthru
      _
    // Predicated region
    $region10: #{tpu_custom_call.1} parent=1 // pred_check
      _
    $region11: #{tpu_custom_call.1} parent=1 // pred_check_branch
      %39 = sbr.rel (0) target = $region13
    $region12: #{tpu_custom_call.1} parent=1 // pred_region
      %s41 = ssub.s32 512, 512
      %42 = vsyncadd [#allocation7], %s41
      %s43 = sshll.u32 [#allocation8], 4
      %s44 = int_to_ptr.vmem [resolvable:$true] %s43
      %49 = dma.hbm_to_vmem [thread:$0]  %s2, 512, %s44, [#allocation7], 128, 128, 8
    $region13: #{tpu_custom_call.1} parent=1 // pred_fallthru
      _
    // Predicated region
    $region14: #{tpu_custom_call.1} parent=1 // pred_check
      _
    $region15: #{tpu_custom_call.1} parent=1 // pred_check_branch
      %51 = sbr.rel (0) target = $region17
    $region16: #{tpu_custom_call.1} parent=1 // pred_region
      %s53 = ssub.s32 512, 512
      %54 = vsyncadd [#allocation10], %s53
      %s55 = sshll.u32 [#allocation9], 4
      %s56 = int_to_ptr.vmem [resolvable:$true] %s55
      %61 = dma.hbm_to_vmem [thread:$0]  %s3, 512, %s56, [#allocation10], 128, 128, 8
    $region17: #{tpu_custom_call.1} parent=1 // pred_fallthru
      _
    // Predicated region
    $region18: #{tpu_custom_call.1} parent=1 // pred_check
      _
    $region19: #{tpu_custom_call.1} parent=1 // pred_check_branch
      %63 = sbr.rel (0) target = $region21
    $region20: #{tpu_custom_call.1} parent=1 // pred_region
      %s65 = ssub.s32 512, 512
      %66 = vsyncadd [#allocation10], %s65
      %s67 = sshll.u32 [#allocation11], 4
      %s68 = int_to_ptr.vmem [resolvable:$true] %s67
      %73 = dma.hbm_to_vmem [thread:$0]  %s4, 512, %s68, [#allocation10], 128, 128, 8
    $region21: #{tpu_custom_call.1} parent=1 // pred_fallthru
      _
    // Predicated region
    $region22: #{tpu_custom_call.1} parent=1 // pred_check
      _
    $region23: #{tpu_custom_call.1} parent=1 // pred_check_branch
      %75 = sbr.rel (0) target = $region25
    $region24: #{tpu_custom_call.1} parent=1 // pred_region
      %76 = dma.done [#allocation4], 2048
    $region25: #{tpu_custom_call.1} parent=1 // pred_fallthru
      _
    // Predicated region
    $region26: #{tpu_custom_call.1} parent=1 // pred_check
      _
    $region27: #{tpu_custom_call.1} parent=1 // pred_check_branch
      %78 = sbr.rel (0) target = $region29
    $region28: #{tpu_custom_call.1} parent=1 // pred_region
      %79 = dma.done [#allocation7], 2048
    $region29: #{tpu_custom_call.1} parent=1 // pred_fallthru
      _
    // Predicated region
    $region30: #{tpu_custom_call.1} parent=1 // pred_check
      _
    $region31: #{tpu_custom_call.1} parent=1 // pred_check_branch
      %81 = sbr.rel (0) target = $region33
    $region32: #{tpu_custom_call.1} parent=1 // pred_region
      %82 = dma.done [#allocation7], 512
    $region33: #{tpu_custom_call.1} parent=1 // pred_fallthru
      _
    // Predicated region
    $region34: #{tpu_custom_call.1} parent=1 // pred_check
      _
    $region35: #{tpu_custom_call.1} parent=1 // pred_check_branch
      %84 = sbr.rel (0) target = $region37
    $region36: #{tpu_custom_call.1} parent=1 // pred_region
      %85 = dma.done [#allocation10], 512
    $region37: #{tpu_custom_call.1} parent=1 // pred_fallthru
      _
    // Predicated region
    $region38: #{tpu_custom_call.1} parent=1 // pred_check
      _
    $region39: #{tpu_custom_call.1} parent=1 // pred_check_branch
      %87 = sbr.rel (0) target = $region41
    $region40: #{tpu_custom_call.1} parent=1 // pred_region
      %88 = dma.done [#allocation10], 512
    $region41: #{tpu_custom_call.1} parent=1 // pred_fallthru
      _
    %v89 = vld [vmem:[#allocation11] sm:$0xff]
    %v90 = vld [vmem:[#allocation11 + $0x8] sm:$0xff]
    %v91 = vld [vmem:[#allocation11 + $0x10] sm:$0xff]
    %v92 = vld [vmem:[#allocation11 + $0x18] sm:$0xff]
    %v93 = vld [vmem:[#allocation8] sm:$0xff]
    %v94 = vld [vmem:[#allocation8 + $0x8] sm:$0xff]
    %v95 = vld [vmem:[#allocation8 + $0x10] sm:$0xff]
    %v96 = vld [vmem:[#allocation8 + $0x18] sm:$0xff]
    %v97 = vld [vmem:[#allocation3] sm:$0xff]
    %v98 = vld [vmem:[#allocation3 + $0x8] sm:$0xff]
    %v99 = vld [vmem:[#allocation3 + $0x10] sm:$0xff]
    %v100 = vld [vmem:[#allocation3 + $0x18] sm:$0xff]
    %v101 = vld [vmem:[#allocation3 + $0x20] sm:$0xff]
    %v102 = vld [vmem:[#allocation3 + $0x28] sm:$0xff]
    %v103 = vld [vmem:[#allocation3 + $0x30] sm:$0xff]
    %v104 = vld [vmem:[#allocation3 + $0x38] sm:$0xff]
    %vm105 = vcmask 261120
    %v107 = vsel %vm105, %v93, 0
    %v110 = vsel %vm105, %v94, 0
    %v113 = vsel %vm105, %v95, 0
    %v116 = vsel %vm105, %v96, 0
    %118 = vmatprep.subr.mxu0 0.0
    %119 = vmatpush1.msra.mxu0 0.0
    %120 = vmatprep.subr.mxu0 0.0
    %121 = vmatpush1.msra.mxu0 0.0
    %122 = vmatprep.subr.mxu0 0.0
    %123 = vmatpush1.msra.mxu0 0.0
    %124 = vmatprep.subr.mxu0 0.0
    %125 = vmatpush1.msra.mxu0 0.0
    %126 = vmatprep.subr.mxu0 0.0
    %127 = vmatpush1.msra.mxu0 0.0
    %128 = vmatprep.subr.mxu0 0.0
    %129 = vmatpush1.msra.mxu0 0.0
    %130 = vmatprep.subr.mxu0 0.0
    %131 = vmatpush1.msra.mxu0 0.0
    %132 = vmatprep.subr.mxu0 0.0
    %133 = vmatpush1.msra.mxu0 0.0
    %134 = vmatprep.subr.mxu0 0.0
    %135 = vmatpush1.msra.mxu0 0.0
    %136 = vmatprep.subr.mxu0 0.0
    %137 = vmatpush1.msra.mxu0 0.0
    %138 = vmatprep.subr.mxu0 0.0
    %139 = vmatpush1.msra.mxu0 0.0
    %140 = vmatprep.subr.mxu0 0.0
    %141 = vmatpush1.msra.mxu0 0.0
    %142 = vmatprep.subr.mxu0 %v104
    %143 = vmatpush1.msra.mxu0 %v103
    %144 = vmatprep.subr.mxu0 %v102
    %145 = vmatpush1.msra.mxu0 %v101
    %146 = vmatprep.subr.mxu0 %v100
    %147 = vmatpush1.msra.mxu0 %v99
    %148 = vmatprep.subr.mxu0 %v98
    %149 = vmatpush1.msra.mxu0 %v97
    %150 = vmatprep.subr.mxu0 0.0
    %151 = vmatpush2.msra.mxu0 0.0
    %152 = vmatprep.subr.mxu0 0.0
    %153 = vmatpush2.msra.mxu0 0.0
    %154 = vmatprep.subr.mxu0 0.0
    %155 = vmatpush2.msra.mxu0 0.0
    %156 = vmatprep.subr.mxu0 0.0
    %157 = vmatpush2.msra.mxu0 0.0
    %158 = vmatprep.subr.mxu0 0.0
    %159 = vmatpush2.msra.mxu0 0.0
    %160 = vmatprep.subr.mxu0 0.0
    %161 = vmatpush2.msra.mxu0 0.0
    %162 = vmatprep.subr.mxu0 0.0
    %163 = vmatpush2.msra.mxu0 0.0
    %164 = vmatprep.subr.mxu0 0.0
    %165 = vmatpush2.msra.mxu0 0.0
    %166 = vmatprep.subr.mxu0 0.0
    %167 = vmatpush2.msra.mxu0 0.0
    %168 = vmatprep.subr.mxu0 0.0
    %169 = vmatpush2.msra.mxu0 0.0
    %170 = vmatprep.subr.mxu0 0.0
    %171 = vmatpush2.msra.mxu0 0.0
    %172 = vmatprep.subr.mxu0 0.0
    %173 = vmatpush2.msra.mxu0 0.0
    %174 = vmatprep.subr.mxu0 0.0
    %175 = vmatpush2.msra.mxu0 0.0
    %176 = vmatprep.subr.mxu0 0.0
    %177 = vmatpush2.msra.mxu0 0.0
    %178 = vmatprep.subr.mxu0 0.0
    %179 = vmatpush2.msra.mxu0 0.0
    %180 = vmatprep.subr.mxu0 0.0
    %181 = vmatpush2.msra.mxu0 0.0
    %182 = vmatprep.mubr.f32.mxu0 0.0
    %183 = vmatmul.mubr.f32.gmra.mxu0 %v107
    %v184 = vpop.f32.mrf.mxu0
    %v185 = vadd.f32 0.0, %v184
    %v186 = vpop.f32.mrf.mxu0
    %v187 = vadd.f32 0.0, %v186
    %188 = vmatprep.mubr.f32.mxu0 0.0
    %189 = vmatmul.mubr.f32.gmra.mxu0 %v110
    %v190 = vpop.f32.mrf.mxu0
    %v191 = vadd.f32 0.0, %v190
    %v192 = vpop.f32.mrf.mxu0
    %v193 = vadd.f32 0.0, %v192
    %194 = vmatprep.mubr.f32.mxu0 0.0
    %195 = vmatmul.mubr.f32.gmra.mxu0 %v113
    %v196 = vpop.f32.mrf.mxu0
    %v197 = vadd.f32 0.0, %v196
    %v198 = vpop.f32.mrf.mxu0
    %v199 = vadd.f32 0.0, %v198
    %200 = vmatprep.mubr.f32.mxu0 0.0
    %201 = vmatmul.mubr.f32.gmra.mxu0 %v116
    %v202 = vpop.f32.mrf.mxu0
    %v203 = vadd.f32 0.0, %v202
    %v204 = vpop.f32.mrf.mxu0
    %v205 = vadd.f32 0.0, %v204
    %206 = vdwg.mxu0
    %207 = vst [vmem:[#allocation2] sm:$0xff] %v185
    %208 = vst [vmem:[#allocation2 + $0x8] sm:$0xff] %v187
    %209 = vst [vmem:[#allocation2 + $0x10] sm:$0xff] %v191
    %210 = vst [vmem:[#allocation2 + $0x18] sm:$0xff] %v193
    %211 = vst [vmem:[#allocation2 + $0x20] sm:$0xff] %v197
    %212 = vst [vmem:[#allocation2 + $0x28] sm:$0xff] %v199
    %213 = vst [vmem:[#allocation2 + $0x30] sm:$0xff] %v203
    %214 = vst [vmem:[#allocation2 + $0x38] sm:$0xff] %v205
    %v215 = vld [vmem:[#allocation2] sm:$0xff]
    %v216 = vld [vmem:[#allocation2 + $0x8] sm:$0xff]
    %v217 = vld [vmem:[#allocation2 + $0x10] sm:$0xff]
    %v218 = vld [vmem:[#allocation2 + $0x18] sm:$0xff]
    %v219 = vld [vmem:[#allocation2 + $0x20] sm:$0xff]
    %v220 = vld [vmem:[#allocation2 + $0x28] sm:$0xff]
    %v221 = vld [vmem:[#allocation2 + $0x30] sm:$0xff]
    %v222 = vld [vmem:[#allocation2 + $0x38] sm:$0xff]
    %v223 = vld [vmem:[#allocation9] sm:$0xff]
    %v224 = vld [vmem:[#allocation9 + $0x8] sm:$0xff]
    %v225 = vld [vmem:[#allocation9 + $0x10] sm:$0xff]
    %v226 = vld [vmem:[#allocation9 + $0x18] sm:$0xff]
    %v227 = vld [vmem:[#allocation6] sm:$0xff]
    %v228 = vld [vmem:[#allocation6 + $0x8] sm:$0xff]
    %v229 = vld [vmem:[#allocation6 + $0x10] sm:$0xff]
    %v230 = vld [vmem:[#allocation6 + $0x18] sm:$0xff]
    %v231 = vld [vmem:[#allocation6 + $0x20] sm:$0xff]
    %v232 = vld [vmem:[#allocation6 + $0x28] sm:$0xff]
    %v233 = vld [vmem:[#allocation6 + $0x30] sm:$0xff]
    %v234 = vld [vmem:[#allocation6 + $0x38] sm:$0xff]
    %v236 = vsel %vm105, %v223, 0
    %v239 = vsel %vm105, %v224, 0
    %v242 = vsel %vm105, %v225, 0
    %v245 = vsel %vm105, %v226, 0
    %247 = vmatprep.subr.mxu0 0.0
    %248 = vmatpush1.msra.mxu0 0.0
    %249 = vmatprep.subr.mxu0 0.0
    %250 = vmatpush1.msra.mxu0 0.0
    %251 = vmatprep.subr.mxu0 0.0
    %252 = vmatpush1.msra.mxu0 0.0
    %253 = vmatprep.subr.mxu0 0.0
    %254 = vmatpush1.msra.mxu0 0.0
    %255 = vmatprep.subr.mxu0 0.0
    %256 = vmatpush1.msra.mxu0 0.0
    %257 = vmatprep.subr.mxu0 0.0
    %258 = vmatpush1.msra.mxu0 0.0
    %259 = vmatprep.subr.mxu0 0.0
    %260 = vmatpush1.msra.mxu0 0.0
    %261 = vmatprep.subr.mxu0 0.0
    %262 = vmatpush1.msra.mxu0 0.0
    %263 = vmatprep.subr.mxu0 0.0
    %264 = vmatpush1.msra.mxu0 0.0
    %265 = vmatprep.subr.mxu0 0.0
    %266 = vmatpush1.msra.mxu0 0.0
    %267 = vmatprep.subr.mxu0 0.0
    %268 = vmatpush1.msra.mxu0 0.0
    %269 = vmatprep.subr.mxu0 0.0
    %270 = vmatpush1.msra.mxu0 0.0
    %271 = vmatprep.subr.mxu0 %v234
    %272 = vmatpush1.msra.mxu0 %v233
    %273 = vmatprep.subr.mxu0 %v232
    %274 = vmatpush1.msra.mxu0 %v231
    %275 = vmatprep.subr.mxu0 %v230
    %276 = vmatpush1.msra.mxu0 %v229
    %277 = vmatprep.subr.mxu0 %v228
    %278 = vmatpush1.msra.mxu0 %v227
    %279 = vmatprep.subr.mxu0 0.0
    %280 = vmatpush2.msra.mxu0 0.0
    %281 = vmatprep.subr.mxu0 0.0
    %282 = vmatpush2.msra.mxu0 0.0
    %283 = vmatprep.subr.mxu0 0.0
    %284 = vmatpush2.msra.mxu0 0.0
    %285 = vmatprep.subr.mxu0 0.0
    %286 = vmatpush2.msra.mxu0 0.0
    %287 = vmatprep.subr.mxu0 0.0
    %288 = vmatpush2.msra.mxu0 0.0
    %289 = vmatprep.subr.mxu0 0.0
    %290 = vmatpush2.msra.mxu0 0.0
    %291 = vmatprep.subr.mxu0 0.0
    %292 = vmatpush2.msra.mxu0 0.0
    %293 = vmatprep.subr.mxu0 0.0
    %294 = vmatpush2.msra.mxu0 0.0
    %295 = vmatprep.subr.mxu0 0.0
    %296 = vmatpush2.msra.mxu0 0.0
    %297 = vmatprep.subr.mxu0 0.0
    %298 = vmatpush2.msra.mxu0 0.0
    %299 = vmatprep.subr.mxu0 0.0
    %300 = vmatpush2.msra.mxu0 0.0
    %301 = vmatprep.subr.mxu0 0.0
    %302 = vmatpush2.msra.mxu0 0.0
    %303 = vmatprep.subr.mxu0 0.0
    %304 = vmatpush2.msra.mxu0 0.0
    %305 = vmatprep.subr.mxu0 0.0
    %306 = vmatpush2.msra.mxu0 0.0
    %307 = vmatprep.subr.mxu0 0.0
    %308 = vmatpush2.msra.mxu0 0.0
    %309 = vmatprep.subr.mxu0 0.0
    %310 = vmatpush2.msra.mxu0 0.0
    %311 = vmatprep.mubr.f32.mxu0 0.0
    %312 = vmatmul.mubr.f32.gmra.mxu0 %v236
    %v313 = vpop.f32.mrf.mxu0
    %v314 = vadd.f32 0.0, %v313
    %v315 = vpop.f32.mrf.mxu0
    %v316 = vadd.f32 0.0, %v315
    %317 = vmatprep.mubr.f32.mxu0 0.0
    %318 = vmatmul.mubr.f32.gmra.mxu0 %v239
    %v319 = vpop.f32.mrf.mxu0
    %v320 = vadd.f32 0.0, %v319
    %v321 = vpop.f32.mrf.mxu0
    %v322 = vadd.f32 0.0, %v321
    %323 = vmatprep.mubr.f32.mxu0 0.0
    %324 = vmatmul.mubr.f32.gmra.mxu0 %v242
    %v325 = vpop.f32.mrf.mxu0
    %v326 = vadd.f32 0.0, %v325
    %v327 = vpop.f32.mrf.mxu0
    %v328 = vadd.f32 0.0, %v327
    %329 = vmatprep.mubr.f32.mxu0 0.0
    %330 = vmatmul.mubr.f32.gmra.mxu0 %v245
    %v331 = vpop.f32.mrf.mxu0
    %v332 = vadd.f32 0.0, %v331
    %v333 = vpop.f32.mrf.mxu0
    %v334 = vadd.f32 0.0, %v333
    %335 = vdwg.mxu0
    %v336 = vadd.f32 %v215, %v314
    %v337 = vadd.f32 %v216, %v316
    %v338 = vadd.f32 %v217, %v320
    %v339 = vadd.f32 %v218, %v322
    %v340 = vadd.f32 %v219, %v326
    %v341 = vadd.f32 %v220, %v328
    %v342 = vadd.f32 %v221, %v332
    %v343 = vadd.f32 %v222, %v334
    %344 = vst [vmem:[#allocation2] sm:$0xff] %v336
    %345 = vst [vmem:[#allocation2 + $0x8] sm:$0xff] %v337
    %346 = vst [vmem:[#allocation2 + $0x10] sm:$0xff] %v338
    %347 = vst [vmem:[#allocation2 + $0x18] sm:$0xff] %v339
    %348 = vst [vmem:[#allocation2 + $0x20] sm:$0xff] %v340
    %349 = vst [vmem:[#allocation2 + $0x28] sm:$0xff] %v341
    %350 = vst [vmem:[#allocation2 + $0x30] sm:$0xff] %v342
    %351 = vst [vmem:[#allocation2 + $0x38] sm:$0xff] %v343
    %v352 = vld [vmem:[#allocation2] sm:$0xff]
    %v353 = vld [vmem:[#allocation2 + $0x8] sm:$0xff]
    %v354 = vld [vmem:[#allocation2 + $0x10] sm:$0xff]
    %v355 = vld [vmem:[#allocation2 + $0x18] sm:$0xff]
    %v356 = vld [vmem:[#allocation2 + $0x20] sm:$0xff]
    %v357 = vld [vmem:[#allocation2 + $0x28] sm:$0xff]
    %v358 = vld [vmem:[#allocation2 + $0x30] sm:$0xff]
    %v359 = vld [vmem:[#allocation2 + $0x38] sm:$0xff]
    %361 = vset.pattern.permute.xlu0 0
    %362 = vperm.xlu0 %361, %v89
    %v363 = vpop.permute.xlu0 %362
    %366 = vset.pattern.permute.xlu0 0
    %367 = vperm.xlu0 %366, %v90
    %v368 = vpop.permute.xlu0 %367
    %371 = vset.pattern.permute.xlu0 0
    %372 = vperm.xlu0 %371, %v91
    %v373 = vpop.permute.xlu0 %372
    %376 = vset.pattern.permute.xlu0 0
    %377 = vperm.xlu0 %376, %v92
    %v378 = vpop.permute.xlu0 %377
    %v380 = vadd.f32 %v352, %v363
    %v381 = vadd.f32 %v353, %v363
    %v382 = vadd.f32 %v354, %v368
    %v383 = vadd.f32 %v355, %v368
    %v384 = vadd.f32 %v356, %v373
    %v385 = vadd.f32 %v357, %v373
    %v386 = vadd.f32 %v358, %v378
    %v387 = vadd.f32 %v359, %v378
    %v388 = vld [vmem:[#allocation3] sm:$0xff]
    %v389 = vld [vmem:[#allocation3 + $0x8] sm:$0xff]
    %v390 = vld [vmem:[#allocation3 + $0x10] sm:$0xff]
    %v391 = vld [vmem:[#allocation3 + $0x18] sm:$0xff]
    %v392 = vld [vmem:[#allocation3 + $0x20] sm:$0xff]
    %v393 = vld [vmem:[#allocation3 + $0x28] sm:$0xff]
    %v394 = vld [vmem:[#allocation3 + $0x30] sm:$0xff]
    %v395 = vld [vmem:[#allocation3 + $0x38] sm:$0xff]
    %v396 = vadd.f32 %v380, %v388
    %v397 = vadd.f32 %v381, %v389
    %v398 = vadd.f32 %v382, %v390
    %v399 = vadd.f32 %v383, %v391
    %v400 = vadd.f32 %v384, %v392
    %v401 = vadd.f32 %v385, %v393
    %v402 = vadd.f32 %v386, %v394
    %v403 = vadd.f32 %v387, %v395
    %v404 = vmax.f32 %v396, 0.0
    %v405 = vmax.f32 %v397, 0.0
    %v406 = vmax.f32 %v398, 0.0
    %v407 = vmax.f32 %v399, 0.0
    %v408 = vmax.f32 %v400, 0.0
    %v409 = vmax.f32 %v401, 0.0
    %v410 = vmax.f32 %v402, 0.0
    %v411 = vmax.f32 %v403, 0.0
    %412 = vst [vmem:[#allocation12] sm:$0xff] %v404
    %413 = vst [vmem:[#allocation12 + $0x8] sm:$0xff] %v405
    %414 = vst [vmem:[#allocation12 + $0x10] sm:$0xff] %v406
    %415 = vst [vmem:[#allocation12 + $0x18] sm:$0xff] %v407
    %416 = vst [vmem:[#allocation12 + $0x20] sm:$0xff] %v408
    %417 = vst [vmem:[#allocation12 + $0x28] sm:$0xff] %v409
    %418 = vst [vmem:[#allocation12 + $0x30] sm:$0xff] %v410
    %419 = vst [vmem:[#allocation12 + $0x38] sm:$0xff] %v411
    %v420 = vld [vmem:[#allocation8] sm:$0xff]
    %v421 = vld [vmem:[#allocation8 + $0x8] sm:$0xff]
    %v422 = vld [vmem:[#allocation8 + $0x10] sm:$0xff]
    %v423 = vld [vmem:[#allocation8 + $0x18] sm:$0xff]
    %s424 = scalar_lea.vmem [#allocation3], 64
    %v425 = vld [vmem:[%s424] sm:$0xff]
    %v426 = vld [vmem:[%s424 + $0x8] sm:$0xff]
    %v427 = vld [vmem:[%s424 + $0x10] sm:$0xff]
    %v428 = vld [vmem:[%s424 + $0x18] sm:$0xff]
    %v429 = vld [vmem:[%s424 + $0x20] sm:$0xff]
    %v430 = vld [vmem:[%s424 + $0x28] sm:$0xff]
    %v431 = vld [vmem:[%s424 + $0x30] sm:$0xff]
    %v432 = vld [vmem:[%s424 + $0x38] sm:$0xff]
    %v434 = vsel %vm105, %v420, 0
    %v437 = vsel %vm105, %v421, 0
    %v440 = vsel %vm105, %v422, 0
    %v443 = vsel %vm105, %v423, 0
    %445 = vmatprep.subr.mxu0 0.0
    %446 = vmatpush1.msra.mxu0 0.0
    %447 = vmatprep.subr.mxu0 0.0
    %448 = vmatpush1.msra.mxu0 0.0
    %449 = vmatprep.subr.mxu0 0.0
    %450 = vmatpush1.msra.mxu0 0.0
    %451 = vmatprep.subr.mxu0 0.0
    %452 = vmatpush1.msra.mxu0 0.0
    %453 = vmatprep.subr.mxu0 0.0
    %454 = vmatpush1.msra.mxu0 0.0
    %455 = vmatprep.subr.mxu0 0.0
    %456 = vmatpush1.msra.mxu0 0.0
    %457 = vmatprep.subr.mxu0 0.0
    %458 = vmatpush1.msra.mxu0 0.0
    %459 = vmatprep.subr.mxu0 0.0
    %460 = vmatpush1.msra.mxu0 0.0
    %461 = vmatprep.subr.mxu0 0.0
    %462 = vmatpush1.msra.mxu0 0.0
    %463 = vmatprep.subr.mxu0 0.0
    %464 = vmatpush1.msra.mxu0 0.0
    %465 = vmatprep.subr.mxu0 0.0
    %466 = vmatpush1.msra.mxu0 0.0
    %467 = vmatprep.subr.mxu0 0.0
    %468 = vmatpush1.msra.mxu0 0.0
    %469 = vmatprep.subr.mxu0 %v432
    %470 = vmatpush1.msra.mxu0 %v431
    %471 = vmatprep.subr.mxu0 %v430
    %472 = vmatpush1.msra.mxu0 %v429
    %473 = vmatprep.subr.mxu0 %v428
    %474 = vmatpush1.msra.mxu0 %v427
    %475 = vmatprep.subr.mxu0 %v426
    %476 = vmatpush1.msra.mxu0 %v425
    %477 = vmatprep.subr.mxu0 0.0
    %478 = vmatpush2.msra.mxu0 0.0
    %479 = vmatprep.subr.mxu0 0.0
    %480 = vmatpush2.msra.mxu0 0.0
    %481 = vmatprep.subr.mxu0 0.0
    %482 = vmatpush2.msra.mxu0 0.0
    %483 = vmatprep.subr.mxu0 0.0
    %484 = vmatpush2.msra.mxu0 0.0
    %485 = vmatprep.subr.mxu0 0.0
    %486 = vmatpush2.msra.mxu0 0.0
    %487 = vmatprep.subr.mxu0 0.0
    %488 = vmatpush2.msra.mxu0 0.0
    %489 = vmatprep.subr.mxu0 0.0
    %490 = vmatpush2.msra.mxu0 0.0
    %491 = vmatprep.subr.mxu0 0.0
    %492 = vmatpush2.msra.mxu0 0.0
    %493 = vmatprep.subr.mxu0 0.0
    %494 = vmatpush2.msra.mxu0 0.0
    %495 = vmatprep.subr.mxu0 0.0
    %496 = vmatpush2.msra.mxu0 0.0
    %497 = vmatprep.subr.mxu0 0.0
    %498 = vmatpush2.msra.mxu0 0.0
    %499 = vmatprep.subr.mxu0 0.0
    %500 = vmatpush2.msra.mxu0 0.0
    %501 = vmatprep.subr.mxu0 0.0
    %502 = vmatpush2.msra.mxu0 0.0
    %503 = vmatprep.subr.mxu0 0.0
    %504 = vmatpush2.msra.mxu0 0.0
    %505 = vmatprep.subr.mxu0 0.0
    %506 = vmatpush2.msra.mxu0 0.0
    %507 = vmatprep.subr.mxu0 0.0
    %508 = vmatpush2.msra.mxu0 0.0
    %509 = vmatprep.mubr.f32.mxu0 0.0
    %510 = vmatmul.mubr.f32.gmra.mxu0 %v434
    %v511 = vpop.f32.mrf.mxu0
    %v512 = vadd.f32 0.0, %v511
    %v513 = vpop.f32.mrf.mxu0
    %v514 = vadd.f32 0.0, %v513
    %515 = vmatprep.mubr.f32.mxu0 0.0
    %516 = vmatmul.mubr.f32.gmra.mxu0 %v437
    %v517 = vpop.f32.mrf.mxu0
    %v518 = vadd.f32 0.0, %v517
    %v519 = vpop.f32.mrf.mxu0
    %v520 = vadd.f32 0.0, %v519
    %521 = vmatprep.mubr.f32.mxu0 0.0
    %522 = vmatmul.mubr.f32.gmra.mxu0 %v440
    %v523 = vpop.f32.mrf.mxu0
    %v524 = vadd.f32 0.0, %v523
    %v525 = vpop.f32.mrf.mxu0
    %v526 = vadd.f32 0.0, %v525
    %527 = vmatprep.mubr.f32.mxu0 0.0
    %528 = vmatmul.mubr.f32.gmra.mxu0 %v443
    %v529 = vpop.f32.mrf.mxu0
    %v530 = vadd.f32 0.0, %v529
    %v531 = vpop.f32.mrf.mxu0
    %v532 = vadd.f32 0.0, %v531
    %533 = vdwg.mxu0
    %534 = vst [vmem:[#allocation2] sm:$0xff] %v512
    %535 = vst [vmem:[#allocation2 + $0x8] sm:$0xff] %v514
    %536 = vst [vmem:[#allocation2 + $0x10] sm:$0xff] %v518
    %537 = vst [vmem:[#allocation2 + $0x18] sm:$0xff] %v520
    %538 = vst [vmem:[#allocation2 + $0x20] sm:$0xff] %v524
    %539 = vst [vmem:[#allocation2 + $0x28] sm:$0xff] %v526
    %540 = vst [vmem:[#allocation2 + $0x30] sm:$0xff] %v530
    %541 = vst [vmem:[#allocation2 + $0x38] sm:$0xff] %v532
    %v542 = vld [vmem:[#allocation2] sm:$0xff]
    %v543 = vld [vmem:[#allocation2 + $0x8] sm:$0xff]
    %v544 = vld [vmem:[#allocation2 + $0x10] sm:$0xff]
    %v545 = vld [vmem:[#allocation2 + $0x18] sm:$0xff]
    %v546 = vld [vmem:[#allocation2 + $0x20] sm:$0xff]
    %v547 = vld [vmem:[#allocation2 + $0x28] sm:$0xff]
    %v548 = vld [vmem:[#allocation2 + $0x30] sm:$0xff]
    %v549 = vld [vmem:[#allocation2 + $0x38] sm:$0xff]
    %v550 = vld [vmem:[#allocation9] sm:$0xff]
    %v551 = vld [vmem:[#allocation9 + $0x8] sm:$0xff]
    %v552 = vld [vmem:[#allocation9 + $0x10] sm:$0xff]
    %v553 = vld [vmem:[#allocation9 + $0x18] sm:$0xff]
    %s554 = scalar_lea.vmem [#allocation6], 64
    %v555 = vld [vmem:[%s554] sm:$0xff]
    %v556 = vld [vmem:[%s554 + $0x8] sm:$0xff]
    %v557 = vld [vmem:[%s554 + $0x10] sm:$0xff]
    %v558 = vld [vmem:[%s554 + $0x18] sm:$0xff]
    %v559 = vld [vmem:[%s554 + $0x20] sm:$0xff]
    %v560 = vld [vmem:[%s554 + $0x28] sm:$0xff]
    %v561 = vld [vmem:[%s554 + $0x30] sm:$0xff]
    %v562 = vld [vmem:[%s554 + $0x38] sm:$0xff]
    %v564 = vsel %vm105, %v550, 0
    %v567 = vsel %vm105, %v551, 0
    %v570 = vsel %vm105, %v552, 0
    %v573 = vsel %vm105, %v553, 0
    %575 = vmatprep.subr.mxu0 0.0
    %576 = vmatpush1.msra.mxu0 0.0
    %577 = vmatprep.subr.mxu0 0.0
    %578 = vmatpush1.msra.mxu0 0.0
    %579 = vmatprep.subr.mxu0 0.0
    %580 = vmatpush1.msra.mxu0 0.0
    %581 = vmatprep.subr.mxu0 0.0
    %582 = vmatpush1.msra.mxu0 0.0
    %583 = vmatprep.subr.mxu0 0.0
    %584 = vmatpush1.msra.mxu0 0.0
    %585 = vmatprep.subr.mxu0 0.0
    %586 = vmatpush1.msra.mxu0 0.0
    %587 = vmatprep.subr.mxu0 0.0
    %588 = vmatpush1.msra.mxu0 0.0
    %589 = vmatprep.subr.mxu0 0.0
    %590 = vmatpush1.msra.mxu0 0.0
    %591 = vmatprep.subr.mxu0 0.0
    %592 = vmatpush1.msra.mxu0 0.0
    %593 = vmatprep.subr.mxu0 0.0
    %594 = vmatpush1.msra.mxu0 0.0
    %595 = vmatprep.subr.mxu0 0.0
    %596 = vmatpush1.msra.mxu0 0.0
    %597 = vmatprep.subr.mxu0 0.0
    %598 = vmatpush1.msra.mxu0 0.0
    %599 = vmatprep.subr.mxu0 %v562
    %600 = vmatpush1.msra.mxu0 %v561
    %601 = vmatprep.subr.mxu0 %v560
    %602 = vmatpush1.msra.mxu0 %v559
    %603 = vmatprep.subr.mxu0 %v558
    %604 = vmatpush1.msra.mxu0 %v557
    %605 = vmatprep.subr.mxu0 %v556
    %606 = vmatpush1.msra.mxu0 %v555
    %607 = vmatprep.subr.mxu0 0.0
    %608 = vmatpush2.msra.mxu0 0.0
    %609 = vmatprep.subr.mxu0 0.0
    %610 = vmatpush2.msra.mxu0 0.0
    %611 = vmatprep.subr.mxu0 0.0
    %612 = vmatpush2.msra.mxu0 0.0
    %613 = vmatprep.subr.mxu0 0.0
    %614 = vmatpush2.msra.mxu0 0.0
    %615 = vmatprep.subr.mxu0 0.0
    %616 = vmatpush2.msra.mxu0 0.0
    %617 = vmatprep.subr.mxu0 0.0
    %618 = vmatpush2.msra.mxu0 0.0
    %619 = vmatprep.subr.mxu0 0.0
    %620 = vmatpush2.msra.mxu0 0.0
    %621 = vmatprep.subr.mxu0 0.0
    %622 = vmatpush2.msra.mxu0 0.0
    %623 = vmatprep.subr.mxu0 0.0
    %624 = vmatpush2.msra.mxu0 0.0
    %625 = vmatprep.subr.mxu0 0.0
    %626 = vmatpush2.msra.mxu0 0.0
    %627 = vmatprep.subr.mxu0 0.0
    %628 = vmatpush2.msra.mxu0 0.0
    %629 = vmatprep.subr.mxu0 0.0
    %630 = vmatpush2.msra.mxu0 0.0
    %631 = vmatprep.subr.mxu0 0.0
    %632 = vmatpush2.msra.mxu0 0.0
    %633 = vmatprep.subr.mxu0 0.0
    %634 = vmatpush2.msra.mxu0 0.0
    %635 = vmatprep.subr.mxu0 0.0
    %636 = vmatpush2.msra.mxu0 0.0
    %637 = vmatprep.subr.mxu0 0.0
    %638 = vmatpush2.msra.mxu0 0.0
    %639 = vmatprep.mubr.f32.mxu0 0.0
    %640 = vmatmul.mubr.f32.gmra.mxu0 %v564
    %v641 = vpop.f32.mrf.mxu0
    %v642 = vadd.f32 0.0, %v641
    %v643 = vpop.f32.mrf.mxu0
    %v644 = vadd.f32 0.0, %v643
    %645 = vmatprep.mubr.f32.mxu0 0.0
    %646 = vmatmul.mubr.f32.gmra.mxu0 %v567
    %v647 = vpop.f32.mrf.mxu0
    %v648 = vadd.f32 0.0, %v647
    %v649 = vpop.f32.mrf.mxu0
    %v650 = vadd.f32 0.0, %v649
    %651 = vmatprep.mubr.f32.mxu0 0.0
    %652 = vmatmul.mubr.f32.gmra.mxu0 %v570
    %v653 = vpop.f32.mrf.mxu0
    %v654 = vadd.f32 0.0, %v653
    %v655 = vpop.f32.mrf.mxu0
    %v656 = vadd.f32 0.0, %v655
    %657 = vmatprep.mubr.f32.mxu0 0.0
    %658 = vmatmul.mubr.f32.gmra.mxu0 %v573
    %v659 = vpop.f32.mrf.mxu0
    %v660 = vadd.f32 0.0, %v659
    %v661 = vpop.f32.mrf.mxu0
    %v662 = vadd.f32 0.0, %v661
    %663 = vdwg.mxu0
    %v664 = vadd.f32 %v542, %v642
    %v665 = vadd.f32 %v543, %v644
    %v666 = vadd.f32 %v544, %v648
    %v667 = vadd.f32 %v545, %v650
    %v668 = vadd.f32 %v546, %v654
    %v669 = vadd.f32 %v547, %v656
    %v670 = vadd.f32 %v548, %v660
    %v671 = vadd.f32 %v549, %v662
    %672 = vst [vmem:[#allocation2] sm:$0xff] %v664
    %673 = vst [vmem:[#allocation2 + $0x8] sm:$0xff] %v665
    %674 = vst [vmem:[#allocation2 + $0x10] sm:$0xff] %v666
    %675 = vst [vmem:[#allocation2 + $0x18] sm:$0xff] %v667
    %676 = vst [vmem:[#allocation2 + $0x20] sm:$0xff] %v668
    %677 = vst [vmem:[#allocation2 + $0x28] sm:$0xff] %v669
    %678 = vst [vmem:[#allocation2 + $0x30] sm:$0xff] %v670
    %679 = vst [vmem:[#allocation2 + $0x38] sm:$0xff] %v671
    %v680 = vld [vmem:[#allocation2] sm:$0xff]
    %v681 = vld [vmem:[#allocation2 + $0x8] sm:$0xff]
    %v682 = vld [vmem:[#allocation2 + $0x10] sm:$0xff]
    %v683 = vld [vmem:[#allocation2 + $0x18] sm:$0xff]
    %v684 = vld [vmem:[#allocation2 + $0x20] sm:$0xff]
    %v685 = vld [vmem:[#allocation2 + $0x28] sm:$0xff]
    %v686 = vld [vmem:[#allocation2 + $0x30] sm:$0xff]
    %v687 = vld [vmem:[#allocation2 + $0x38] sm:$0xff]
    %v688 = vadd.f32 %v680, %v363
    %v689 = vadd.f32 %v681, %v363
    %v690 = vadd.f32 %v682, %v368
    %v691 = vadd.f32 %v683, %v368
    %v692 = vadd.f32 %v684, %v373
    %v693 = vadd.f32 %v685, %v373
    %v694 = vadd.f32 %v686, %v378
    %v695 = vadd.f32 %v687, %v378
    %v696 = vld [vmem:[%s424] sm:$0xff]
    %v697 = vld [vmem:[%s424 + $0x8] sm:$0xff]
    %v698 = vld [vmem:[%s424 + $0x10] sm:$0xff]
    %v699 = vld [vmem:[%s424 + $0x18] sm:$0xff]
    %v700 = vld [vmem:[%s424 + $0x20] sm:$0xff]
    %v701 = vld [vmem:[%s424 + $0x28] sm:$0xff]
    %v702 = vld [vmem:[%s424 + $0x30] sm:$0xff]
    %v703 = vld [vmem:[%s424 + $0x38] sm:$0xff]
    %v704 = vadd.f32 %v688, %v696
    %v705 = vadd.f32 %v689, %v697
    %v706 = vadd.f32 %v690, %v698
    %v707 = vadd.f32 %v691, %v699
    %v708 = vadd.f32 %v692, %v700
    %v709 = vadd.f32 %v693, %v701
    %v710 = vadd.f32 %v694, %v702
    %v711 = vadd.f32 %v695, %v703
    %v712 = vmax.f32 %v704, 0.0
    %v713 = vmax.f32 %v705, 0.0
    %v714 = vmax.f32 %v706, 0.0
    %v715 = vmax.f32 %v707, 0.0
    %v716 = vmax.f32 %v708, 0.0
    %v717 = vmax.f32 %v709, 0.0
    %v718 = vmax.f32 %v710, 0.0
    %v719 = vmax.f32 %v711, 0.0
    %s720 = scalar_lea.vmem [#allocation12], 64
    %721 = vst [vmem:[%s720] sm:$0xff] %v712
    %722 = vst [vmem:[%s720 + $0x8] sm:$0xff] %v713
    %723 = vst [vmem:[%s720 + $0x10] sm:$0xff] %v714
    %724 = vst [vmem:[%s720 + $0x18] sm:$0xff] %v715
    %725 = vst [vmem:[%s720 + $0x20] sm:$0xff] %v716
    %726 = vst [vmem:[%s720 + $0x28] sm:$0xff] %v717
    %727 = vst [vmem:[%s720 + $0x30] sm:$0xff] %v718
    %728 = vst [vmem:[%s720 + $0x38] sm:$0xff] %v719
    // Predicated region
    $region42: #{tpu_custom_call.1} parent=1 // pred_check
      _
    $region43: #{tpu_custom_call.1} parent=1 // pred_check_branch
      %730 = sbr.rel (0) target = $region45
    $region44: #{tpu_custom_call.1} parent=1 // pred_region
      %s732 = ssub.s32 2048, 2048
      %733 = vsyncadd [#allocation5], %s732
      %s734 = sshll.u32 [#allocation12], 4
      %s735 = int_to_ptr.vmem [resolvable:$true] %s734
      %740 = dma.vmem_to_hbm [thread:$0]  %s735, 2048, %s5, [#allocation5], 256, 256, 16
    $region45: #{tpu_custom_call.1} parent=1 // pred_fallthru
      _
    // Predicated region
    $region46: #{tpu_custom_call.1} parent=1 // pred_check
      _
    $region47: #{tpu_custom_call.1} parent=1 // pred_check_branch
      %742 = sbr.rel (0) target = $region49
    $region48: #{tpu_custom_call.1} parent=1 // pred_region
      %743 = dma.done [#allocation5], 2048
    $region49: #{tpu_custom_call.1} parent=1 // pred_fallthru
      _
    %744 = vsyncpa [#allocation4], 1
    %745 = vsyncpa [#allocation7], 1
    %746 = vsyncpa [#allocation10], 1
    %747 = vsyncpa [#allocation5], 1

// kernel: tpu_custom_call.1
$region0: #{tpu_custom_call.1}
  #allocation0 [shape = 'u32[]', space=smem, size = 0x4, offset = 0x4, fixed_abs, tag = 'smem constant byte address 0x4 - core index']
  #allocation1 [shape = 'u32[144,128]{1,0:T(1,128)}', space=vmem, size = 0x12000, scoped, tag = 'internal scratch']
  #allocation2 [shape = 'f32[32,256]{1,0:T(8,128)}', space=vmem, size = 0x8000, scoped, tag = 'scratch operand']
  %s0 = inlined_call_operand.hbm [shape: f32[2,32,256], index: 0, kind: input, shape index: {}]
  %s1 = inlined_call_operand.hbm [shape: f32[2,32,256], index: 1, kind: input, shape index: {}]
  %s2 = inlined_call_operand.hbm [shape: f32[32,32], index: 2, kind: input, shape index: {}]
  %s3 = inlined_call_operand.hbm [shape: f32[32,32], index: 3, kind: input, shape index: {}]
  %s4 = inlined_call_operand.hbm [shape: f32[32,128], index: 4, kind: input, shape index: {}]
  %s5 = inlined_call_operand.hbm [shape: f32[2,32,256], index: 5, kind: output, shape index: {}]
  %s6 = sld [smem:[#allocation0]]
  $region50: #{tpu_custom_call.1} parent=0
    _
  %s8 = ssub.s32 1, %s6
  %s9 = scalar_select 0, %s8, %s6
  $region1: #{tpu_custom_call.1} parent=0
    #allocation3 [shape = 'u8[65536]{0}', space=vmem, size = 0x10000, scoped, tag = 'input window, operand 0, single buffered']
    #allocation4 [shape = 's32[1]{0}', space=sflag, size = 0x4, scoped, tag = 'scoped memory for tpu_custom_call.1']
    #allocation5 [shape = 's32[1]{0}', space=sflag, size = 0x4, scoped, tag = 'scoped memory for tpu_custom_call.1']
    #allocation6 [shape = 'u8[65536]{0}', space=vmem, size = 0x10000, scoped, tag = 'input window, operand 1, single buffered']
    #allocation7 [shape = 's32[1]{0}', space=sflag, size = 0x4, scoped, tag = 'scoped memory for tpu_custom_call.1']
    #allocation8 [shape = 'u8[16384]{0}', space=vmem, size = 0x4000, scoped, tag = 'input window, operand 2, single buffered']
    #allocation9 [shape = 'u8[16384]{0}', space=vmem, size = 0x4000, scoped, tag = 'input window, operand 3, single buffered']
    #allocation10 [shape = 's32[1]{0}', space=sflag, size = 0x4, scoped, tag = 'scoped memory for tpu_custom_call.1']
    #allocation11 [shape = 'u8[16384]{0}', space=vmem, size = 0x4000, scoped, tag = 'input window, operand 4, single buffered']
    #allocation12 [shape = 'u8[65536]{0}', space=vmem, size = 0x10000, scoped, tag = 'output window, operand 0, single buffered']
    %10 = vsyncpa [#allocation4], 0
    %11 = vsyncpa [#allocation7], 0
    %12 = vsyncpa [#allocation10], 0
    %13 = vsyncpa [#allocation5], 0
    // Predicated region
    $region2: #{tpu_custom_call.1} parent=1 // pred_check
      _
    $region3: #{tpu_custom_call.1} parent=1 // pred_check_branch
      %15 = sbr.rel (0) target = $region5
    $region4: #{tpu_custom_call.1} parent=1 // pred_region
      %s17 = ssub.s32 2048, 2048
      %18 = vsyncadd [#allocation4], %s17
      %s19 = sshll.u32 [#allocation3], 4
      %s20 = int_to_ptr.vmem [resolvable:$true] %s19
      %25 = dma.hbm_to_vmem [thread:$0]  %s0, 2048, %s20, [#allocation4], 256, 256, 16
    $region5: #{tpu_custom_call.1} parent=1 // pred_fallthru
      _
    // Predicated region
    $region6: #{tpu_custom_call.1} parent=1 // pred_check
      _
    $region7: #{tpu_custom_call.1} parent=1 // pred_check_branch
      %27 = sbr.rel (0) target = $region9
    $region8: #{tpu_custom_call.1} parent=1 // pred_region
      %s29 = ssub.s32 2048, 2048
      %30 = vsyncadd [#allocation7], %s29
      %s31 = sshll.u32 [#allocation6], 4
      %s32 = int_to_ptr.vmem [resolvable:$true] %s31
      %37 = dma.hbm_to_vmem [thread:$0]  %s1, 2048, %s32, [#allocation7], 256, 256, 16
    $region9: #{tpu_custom_call.1} parent=1 // pred_fallthru
      _
    // Predicated region
    $region10: #{tpu_custom_call.1} parent=1 // pred_check
      _
    $region11: #{tpu_custom_call.1} parent=1 // pred_check_branch
      %39 = sbr.rel (0) target = $region13
    $region12: #{tpu_custom_call.1} parent=1 // pred_region
      %s41 = ssub.s32 512, 512
      %42 = vsyncadd [#allocation7], %s41
      %s43 = sshll.u32 [#allocation8], 4
      %s44 = int_to_ptr.vmem [resolvable:$true] %s43
      %49 = dma.hbm_to_vmem [thread:$0]  %s2, 512, %s44, [#allocation7], 128, 128, 8
    $region13: #{tpu_custom_call.1} parent=1 // pred_fallthru
      _
    // Predicated region
    $region14: #{tpu_custom_call.1} parent=1 // pred_check
      _
    $region15: #{tpu_custom_call.1} parent=1 // pred_check_branch
      %51 = sbr.rel (0) target = $region17
    $region16: #{tpu_custom_call.1} parent=1 // pred_region
      %s53 = ssub.s32 512, 512
      %54 = vsyncadd [#allocation10], %s53
      %s55 = sshll.u32 [#allocation9], 4
      %s56 = int_to_ptr.vmem [resolvable:$true] %s55
      %61 = dma.hbm_to_vmem [thread:$0]  %s3, 512, %s56, [#allocation10], 128, 128, 8
    $region17: #{tpu_custom_call.1} parent=1 // pred_fallthru
      _
    // Predicated region
    $region18: #{tpu_custom_call.1} parent=1 // pred_check
      _
    $region19: #{tpu_custom_call.1} parent=1 // pred_check_branch
      %63 = sbr.rel (0) target = $region21
    $region20: #{tpu_custom_call.1} parent=1 // pred_region
      %s65 = ssub.s32 512, 512
      %66 = vsyncadd [#allocation10], %s65
      %s67 = sshll.u32 [#allocation11], 4
      %s68 = int_to_ptr.vmem [resolvable:$true] %s67
      %73 = dma.hbm_to_vmem [thread:$0]  %s4, 512, %s68, [#allocation10], 128, 128, 8
    $region21: #{tpu_custom_call.1} parent=1 // pred_fallthru
      _
    // Predicated region
    $region22: #{tpu_custom_call.1} parent=1 // pred_check
      _
    $region23: #{tpu_custom_call.1} parent=1 // pred_check_branch
      %75 = sbr.rel (0) target = $region25
    $region24: #{tpu_custom_call.1} parent=1 // pred_region
      %76 = dma.done [#allocation4], 2048
    $region25: #{tpu_custom_call.1} parent=1 // pred_fallthru
      _
    // Predicated region
    $region26: #{tpu_custom_call.1} parent=1 // pred_check
      _
    $region27: #{tpu_custom_call.1} parent=1 // pred_check_branch
      %78 = sbr.rel (0) target = $region29
    $region28: #{tpu_custom_call.1} parent=1 // pred_region
      %79 = dma.done [#allocation7], 2048
    $region29: #{tpu_custom_call.1} parent=1 // pred_fallthru
      _
    // Predicated region
    $region30: #{tpu_custom_call.1} parent=1 // pred_check
      _
    $region31: #{tpu_custom_call.1} parent=1 // pred_check_branch
      %81 = sbr.rel (0) target = $region33
    $region32: #{tpu_custom_call.1} parent=1 // pred_region
      %82 = dma.done [#allocation7], 512
    $region33: #{tpu_custom_call.1} parent=1 // pred_fallthru
      _
    // Predicated region
    $region34: #{tpu_custom_call.1} parent=1 // pred_check
      _
    $region35: #{tpu_custom_call.1} parent=1 // pred_check_branch
      %84 = sbr.rel (0) target = $region37
    $region36: #{tpu_custom_call.1} parent=1 // pred_region
      %85 = dma.done [#allocation10], 512
    $region37: #{tpu_custom_call.1} parent=1 // pred_fallthru
      _
    // Predicated region
    $region38: #{tpu_custom_call.1} parent=1 // pred_check
      _
    $region39: #{tpu_custom_call.1} parent=1 // pred_check_branch
      %87 = sbr.rel (0) target = $region41
    $region40: #{tpu_custom_call.1} parent=1 // pred_region
      %88 = dma.done [#allocation10], 512
    $region41: #{tpu_custom_call.1} parent=1 // pred_fallthru
      _
    %v89 = vld [vmem:[#allocation11] sm:$0xff]
    %v90 = vld [vmem:[#allocation11 + $0x8] sm:$0xff]
    %v91 = vld [vmem:[#allocation11 + $0x10] sm:$0xff]
    %v92 = vld [vmem:[#allocation11 + $0x18] sm:$0xff]
    %v93 = vld [vmem:[#allocation8] sm:$0xff]
    %v94 = vld [vmem:[#allocation8 + $0x8] sm:$0xff]
    %v95 = vld [vmem:[#allocation8 + $0x10] sm:$0xff]
    %v96 = vld [vmem:[#allocation8 + $0x18] sm:$0xff]
    %v97 = vld [vmem:[#allocation3] sm:$0xff]
    %v98 = vld [vmem:[#allocation3 + $0x8] sm:$0xff]
    %v99 = vld [vmem:[#allocation3 + $0x10] sm:$0xff]
    %v100 = vld [vmem:[#allocation3 + $0x18] sm:$0xff]
    %v101 = vld [vmem:[#allocation3 + $0x20] sm:$0xff]
    %v102 = vld [vmem:[#allocation3 + $0x28] sm:$0xff]
    %v103 = vld [vmem:[#allocation3 + $0x30] sm:$0xff]
    %v104 = vld [vmem:[#allocation3 + $0x38] sm:$0xff]
    %vm105 = vcmask 261120
    %v107 = vsel %vm105, %v93, 0
    %v110 = vsel %vm105, %v94, 0
    %v113 = vsel %vm105, %v95, 0
    %v116 = vsel %vm105, %v96, 0
    %118 = vmatprep.subr.mxu0 0.0
    %119 = vmatpush1.msra.mxu0 0.0
    %120 = vmatprep.subr.mxu0 0.0
    %121 = vmatpush1.msra.mxu0 0.0
    %122 = vmatprep.subr.mxu0 0.0
    %123 = vmatpush1.msra.mxu0 0.0
    %124 = vmatprep.subr.mxu0 0.0
    %125 = vmatpush1.msra.mxu0 0.0
    %126 = vmatprep.subr.mxu0 0.0
    %127 = vmatpush1.msra.mxu0 0.0
    %128 = vmatprep.subr.mxu0 0.0
    %129 = vmatpush1.msra.mxu0 0.0
    %130 = vmatprep.subr.mxu0 0.0
    %131 = vmatpush1.msra.mxu0 0.0
    %132 = vmatprep.subr.mxu0 0.0
    %133 = vmatpush1.msra.mxu0 0.0
    %134 = vmatprep.subr.mxu0 0.0
    %135 = vmatpush1.msra.mxu0 0.0
    %136 = vmatprep.subr.mxu0 0.0
    %137 = vmatpush1.msra.mxu0 0.0
    %138 = vmatprep.subr.mxu0 0.0
    %139 = vmatpush1.msra.mxu0 0.0
    %140 = vmatprep.subr.mxu0 0.0
    %141 = vmatpush1.msra.mxu0 0.0
    %142 = vmatprep.subr.mxu0 %v104
    %143 = vmatpush1.msra.mxu0 %v103
    %144 = vmatprep.subr.mxu0 %v102
    %145 = vmatpush1.msra.mxu0 %v101
    %146 = vmatprep.subr.mxu0 %v100
    %147 = vmatpush1.msra.mxu0 %v99
    %148 = vmatprep.subr.mxu0 %v98
    %149 = vmatpush1.msra.mxu0 %v97
    %150 = vmatprep.subr.mxu0 0.0
    %151 = vmatpush2.msra.mxu0 0.0
    %152 = vmatprep.subr.mxu0 0.0
    %153 = vmatpush2.msra.mxu0 0.0
    %154 = vmatprep.subr.mxu0 0.0
    %155 = vmatpush2.msra.mxu0 0.0
    %156 = vmatprep.subr.mxu0 0.0
    %157 = vmatpush2.msra.mxu0 0.0
    %158 = vmatprep.subr.mxu0 0.0
    %159 = vmatpush2.msra.mxu0 0.0
    %160 = vmatprep.subr.mxu0 0.0
    %161 = vmatpush2.msra.mxu0 0.0
    %162 = vmatprep.subr.mxu0 0.0
    %163 = vmatpush2.msra.mxu0 0.0
    %164 = vmatprep.subr.mxu0 0.0
    %165 = vmatpush2.msra.mxu0 0.0
    %166 = vmatprep.subr.mxu0 0.0
    %167 = vmatpush2.msra.mxu0 0.0
    %168 = vmatprep.subr.mxu0 0.0
    %169 = vmatpush2.msra.mxu0 0.0
    %170 = vmatprep.subr.mxu0 0.0
    %171 = vmatpush2.msra.mxu0 0.0
    %172 = vmatprep.subr.mxu0 0.0
    %173 = vmatpush2.msra.mxu0 0.0
    %174 = vmatprep.subr.mxu0 0.0
    %175 = vmatpush2.msra.mxu0 0.0
    %176 = vmatprep.subr.mxu0 0.0
    %177 = vmatpush2.msra.mxu0 0.0
    %178 = vmatprep.subr.mxu0 0.0
    %179 = vmatpush2.msra.mxu0 0.0
    %180 = vmatprep.subr.mxu0 0.0
    %181 = vmatpush2.msra.mxu0 0.0
    %182 = vmatprep.mubr.f32.mxu0 0.0
    %183 = vmatmul.mubr.f32.gmra.mxu0 %v107
    %v184 = vpop.f32.mrf.mxu0
    %v185 = vadd.f32 0.0, %v184
    %v186 = vpop.f32.mrf.mxu0
    %v187 = vadd.f32 0.0, %v186
    %188 = vmatprep.mubr.f32.mxu0 0.0
    %189 = vmatmul.mubr.f32.gmra.mxu0 %v110
    %v190 = vpop.f32.mrf.mxu0
    %v191 = vadd.f32 0.0, %v190
    %v192 = vpop.f32.mrf.mxu0
    %v193 = vadd.f32 0.0, %v192
    %194 = vmatprep.mubr.f32.mxu0 0.0
    %195 = vmatmul.mubr.f32.gmra.mxu0 %v113
    %v196 = vpop.f32.mrf.mxu0
    %v197 = vadd.f32 0.0, %v196
    %v198 = vpop.f32.mrf.mxu0
    %v199 = vadd.f32 0.0, %v198
    %200 = vmatprep.mubr.f32.mxu0 0.0
    %201 = vmatmul.mubr.f32.gmra.mxu0 %v116
    %v202 = vpop.f32.mrf.mxu0
    %v203 = vadd.f32 0.0, %v202
    %v204 = vpop.f32.mrf.mxu0
    %v205 = vadd.f32 0.0, %v204
    %206 = vdwg.mxu0
    %207 = vst [vmem:[#allocation2] sm:$0xff] %v185
    %208 = vst [vmem:[#allocation2 + $0x8] sm:$0xff] %v187
    %209 = vst [vmem:[#allocation2 + $0x10] sm:$0xff] %v191
    %210 = vst [vmem:[#allocation2 + $0x18] sm:$0xff] %v193
    %211 = vst [vmem:[#allocation2 + $0x20] sm:$0xff] %v197
    %212 = vst [vmem:[#allocation2 + $0x28] sm:$0xff] %v199
    %213 = vst [vmem:[#allocation2 + $0x30] sm:$0xff] %v203
    %214 = vst [vmem:[#allocation2 + $0x38] sm:$0xff] %v205
    %v215 = vld [vmem:[#allocation2] sm:$0xff]
    %v216 = vld [vmem:[#allocation2 + $0x8] sm:$0xff]
    %v217 = vld [vmem:[#allocation2 + $0x10] sm:$0xff]
    %v218 = vld [vmem:[#allocation2 + $0x18] sm:$0xff]
    %v219 = vld [vmem:[#allocation2 + $0x20] sm:$0xff]
    %v220 = vld [vmem:[#allocation2 + $0x28] sm:$0xff]
    %v221 = vld [vmem:[#allocation2 + $0x30] sm:$0xff]
    %v222 = vld [vmem:[#allocation2 + $0x38] sm:$0xff]
    %v223 = vld [vmem:[#allocation9] sm:$0xff]
    %v224 = vld [vmem:[#allocation9 + $0x8] sm:$0xff]
    %v225 = vld [vmem:[#allocation9 + $0x10] sm:$0xff]
    %v226 = vld [vmem:[#allocation9 + $0x18] sm:$0xff]
    %v227 = vld [vmem:[#allocation6] sm:$0xff]
    %v228 = vld [vmem:[#allocation6 + $0x8] sm:$0xff]
    %v229 = vld [vmem:[#allocation6 + $0x10] sm:$0xff]
    %v230 = vld [vmem:[#allocation6 + $0x18] sm:$0xff]
    %v231 = vld [vmem:[#allocation6 + $0x20] sm:$0xff]
    %v232 = vld [vmem:[#allocation6 + $0x28] sm:$0xff]
    %v233 = vld [vmem:[#allocation6 + $0x30] sm:$0xff]
    %v234 = vld [vmem:[#allocation6 + $0x38] sm:$0xff]
    %v236 = vsel %vm105, %v223, 0
    %v239 = vsel %vm105, %v224, 0
    %v242 = vsel %vm105, %v225, 0
    %v245 = vsel %vm105, %v226, 0
    %247 = vmatprep.subr.mxu0 0.0
    %248 = vmatpush1.msra.mxu0 0.0
    %249 = vmatprep.subr.mxu0 0.0
    %250 = vmatpush1.msra.mxu0 0.0
    %251 = vmatprep.subr.mxu0 0.0
    %252 = vmatpush1.msra.mxu0 0.0
    %253 = vmatprep.subr.mxu0 0.0
    %254 = vmatpush1.msra.mxu0 0.0
    %255 = vmatprep.subr.mxu0 0.0
    %256 = vmatpush1.msra.mxu0 0.0
    %257 = vmatprep.subr.mxu0 0.0
    %258 = vmatpush1.msra.mxu0 0.0
    %259 = vmatprep.subr.mxu0 0.0
    %260 = vmatpush1.msra.mxu0 0.0
    %261 = vmatprep.subr.mxu0 0.0
    %262 = vmatpush1.msra.mxu0 0.0
    %263 = vmatprep.subr.mxu0 0.0
    %264 = vmatpush1.msra.mxu0 0.0
    %265 = vmatprep.subr.mxu0 0.0
    %266 = vmatpush1.msra.mxu0 0.0
    %267 = vmatprep.subr.mxu0 0.0
    %268 = vmatpush1.msra.mxu0 0.0
    %269 = vmatprep.subr.mxu0 0.0
    %270 = vmatpush1.msra.mxu0 0.0
    %271 = vmatprep.subr.mxu0 %v234
    %272 = vmatpush1.msra.mxu0 %v233
    %273 = vmatprep.subr.mxu0 %v232
    %274 = vmatpush1.msra.mxu0 %v231
    %275 = vmatprep.subr.mxu0 %v230
    %276 = vmatpush1.msra.mxu0 %v229
    %277 = vmatprep.subr.mxu0 %v228
    %278 = vmatpush1.msra.mxu0 %v227
    %279 = vmatprep.subr.mxu0 0.0
    %280 = vmatpush2.msra.mxu0 0.0
    %281 = vmatprep.subr.mxu0 0.0
    %282 = vmatpush2.msra.mxu0 0.0
    %283 = vmatprep.subr.mxu0 0.0
    %284 = vmatpush2.msra.mxu0 0.0
    %285 = vmatprep.subr.mxu0 0.0
    %286 = vmatpush2.msra.mxu0 0.0
    %287 = vmatprep.subr.mxu0 0.0
    %288 = vmatpush2.msra.mxu0 0.0
    %289 = vmatprep.subr.mxu0 0.0
    %290 = vmatpush2.msra.mxu0 0.0
    %291 = vmatprep.subr.mxu0 0.0
    %292 = vmatpush2.msra.mxu0 0.0
    %293 = vmatprep.subr.mxu0 0.0
    %294 = vmatpush2.msra.mxu0 0.0
    %295 = vmatprep.subr.mxu0 0.0
    %296 = vmatpush2.msra.mxu0 0.0
    %297 = vmatprep.subr.mxu0 0.0
    %298 = vmatpush2.msra.mxu0 0.0
    %299 = vmatprep.subr.mxu0 0.0
    %300 = vmatpush2.msra.mxu0 0.0
    %301 = vmatprep.subr.mxu0 0.0
    %302 = vmatpush2.msra.mxu0 0.0
    %303 = vmatprep.subr.mxu0 0.0
    %304 = vmatpush2.msra.mxu0 0.0
    %305 = vmatprep.subr.mxu0 0.0
    %306 = vmatpush2.msra.mxu0 0.0
    %307 = vmatprep.subr.mxu0 0.0
    %308 = vmatpush2.msra.mxu0 0.0
    %309 = vmatprep.subr.mxu0 0.0
    %310 = vmatpush2.msra.mxu0 0.0
    %311 = vmatprep.mubr.f32.mxu0 0.0
    %312 = vmatmul.mubr.f32.gmra.mxu0 %v236
    %v313 = vpop.f32.mrf.mxu0
    %v314 = vadd.f32 0.0, %v313
    %v315 = vpop.f32.mrf.mxu0
    %v316 = vadd.f32 0.0, %v315
    %317 = vmatprep.mubr.f32.mxu0 0.0
    %318 = vmatmul.mubr.f32.gmra.mxu0 %v239
    %v319 = vpop.f32.mrf.mxu0
    %v320 = vadd.f32 0.0, %v319
    %v321 = vpop.f32.mrf.mxu0
    %v322 = vadd.f32 0.0, %v321
    %323 = vmatprep.mubr.f32.mxu0 0.0
    %324 = vmatmul.mubr.f32.gmra.mxu0 %v242
    %v325 = vpop.f32.mrf.mxu0
    %v326 = vadd.f32 0.0, %v325
    %v327 = vpop.f32.mrf.mxu0
    %v328 = vadd.f32 0.0, %v327
    %329 = vmatprep.mubr.f32.mxu0 0.0
    %330 = vmatmul.mubr.f32.gmra.mxu0 %v245
    %v331 = vpop.f32.mrf.mxu0
    %v332 = vadd.f32 0.0, %v331
    %v333 = vpop.f32.mrf.mxu0
    %v334 = vadd.f32 0.0, %v333
    %335 = vdwg.mxu0
    %v336 = vadd.f32 %v215, %v314
    %v337 = vadd.f32 %v216, %v316
    %v338 = vadd.f32 %v217, %v320
    %v339 = vadd.f32 %v218, %v322
    %v340 = vadd.f32 %v219, %v326
    %v341 = vadd.f32 %v220, %v328
    %v342 = vadd.f32 %v221, %v332
    %v343 = vadd.f32 %v222, %v334
    %344 = vst [vmem:[#allocation2] sm:$0xff] %v336
    %345 = vst [vmem:[#allocation2 + $0x8] sm:$0xff] %v337
    %346 = vst [vmem:[#allocation2 + $0x10] sm:$0xff] %v338
    %347 = vst [vmem:[#allocation2 + $0x18] sm:$0xff] %v339
    %348 = vst [vmem:[#allocation2 + $0x20] sm:$0xff] %v340
    %349 = vst [vmem:[#allocation2 + $0x28] sm:$0xff] %v341
    %350 = vst [vmem:[#allocation2 + $0x30] sm:$0xff] %v342
    %351 = vst [vmem:[#allocation2 + $0x38] sm:$0xff] %v343
    %v352 = vld [vmem:[#allocation2] sm:$0xff]
    %v353 = vld [vmem:[#allocation2 + $0x8] sm:$0xff]
    %v354 = vld [vmem:[#allocation2 + $0x10] sm:$0xff]
    %v355 = vld [vmem:[#allocation2 + $0x18] sm:$0xff]
    %v356 = vld [vmem:[#allocation2 + $0x20] sm:$0xff]
    %v357 = vld [vmem:[#allocation2 + $0x28] sm:$0xff]
    %v358 = vld [vmem:[#allocation2 + $0x30] sm:$0xff]
    %v359 = vld [vmem:[#allocation2 + $0x38] sm:$0xff]
    %361 = vset.pattern.permute.xlu0 0
    %362 = vperm.xlu0 %361, %v89
    %v363 = vpop.permute.xlu0 %362
    %366 = vset.pattern.permute.xlu0 0
    %367 = vperm.xlu0 %366, %v90
    %v368 = vpop.permute.xlu0 %367
    %371 = vset.pattern.permute.xlu0 0
    %372 = vperm.xlu0 %371, %v91
    %v373 = vpop.permute.xlu0 %372
    %376 = vset.pattern.permute.xlu0 0
    %377 = vperm.xlu0 %376, %v92
    %v378 = vpop.permute.xlu0 %377
    %v380 = vadd.f32 %v352, %v363
    %v381 = vadd.f32 %v353, %v363
    %v382 = vadd.f32 %v354, %v368
    %v383 = vadd.f32 %v355, %v368
    %v384 = vadd.f32 %v356, %v373
    %v385 = vadd.f32 %v357, %v373
    %v386 = vadd.f32 %v358, %v378
    %v387 = vadd.f32 %v359, %v378
    %v388 = vld [vmem:[#allocation3] sm:$0xff]
    %v389 = vld [vmem:[#allocation3 + $0x8] sm:$0xff]
    %v390 = vld [vmem:[#allocation3 + $0x10] sm:$0xff]
    %v391 = vld [vmem:[#allocation3 + $0x18] sm:$0xff]
    %v392 = vld [vmem:[#allocation3 + $0x20] sm:$0xff]
    %v393 = vld [vmem:[#allocation3 + $0x28] sm:$0xff]
    %v394 = vld [vmem:[#allocation3 + $0x30] sm:$0xff]
    %v395 = vld [vmem:[#allocation3 + $0x38] sm:$0xff]
    %v396 = vadd.f32 %v380, %v388
    %v397 = vadd.f32 %v381, %v389
    %v398 = vadd.f32 %v382, %v390
    %v399 = vadd.f32 %v383, %v391
    %v400 = vadd.f32 %v384, %v392
    %v401 = vadd.f32 %v385, %v393
    %v402 = vadd.f32 %v386, %v394
    %v403 = vadd.f32 %v387, %v395
    %v404 = vmax.f32 %v396, 0.0
    %v405 = vmax.f32 %v397, 0.0
    %v406 = vmax.f32 %v398, 0.0
    %v407 = vmax.f32 %v399, 0.0
    %v408 = vmax.f32 %v400, 0.0
    %v409 = vmax.f32 %v401, 0.0
    %v410 = vmax.f32 %v402, 0.0
    %v411 = vmax.f32 %v403, 0.0
    %412 = vst [vmem:[#allocation12] sm:$0xff] %v404
    %413 = vst [vmem:[#allocation12 + $0x8] sm:$0xff] %v405
    %414 = vst [vmem:[#allocation12 + $0x10] sm:$0xff] %v406
    %415 = vst [vmem:[#allocation12 + $0x18] sm:$0xff] %v407
    %416 = vst [vmem:[#allocation12 + $0x20] sm:$0xff] %v408
    %417 = vst [vmem:[#allocation12 + $0x28] sm:$0xff] %v409
    %418 = vst [vmem:[#allocation12 + $0x30] sm:$0xff] %v410
    %419 = vst [vmem:[#allocation12 + $0x38] sm:$0xff] %v411
    %v420 = vld [vmem:[#allocation8] sm:$0xff]
    %v421 = vld [vmem:[#allocation8 + $0x8] sm:$0xff]
    %v422 = vld [vmem:[#allocation8 + $0x10] sm:$0xff]
    %v423 = vld [vmem:[#allocation8 + $0x18] sm:$0xff]
    %s424 = scalar_lea.vmem [#allocation3], 64
    %v425 = vld [vmem:[%s424] sm:$0xff]
    %v426 = vld [vmem:[%s424 + $0x8] sm:$0xff]
    %v427 = vld [vmem:[%s424 + $0x10] sm:$0xff]
    %v428 = vld [vmem:[%s424 + $0x18] sm:$0xff]
    %v429 = vld [vmem:[%s424 + $0x20] sm:$0xff]
    %v430 = vld [vmem:[%s424 + $0x28] sm:$0xff]
    %v431 = vld [vmem:[%s424 + $0x30] sm:$0xff]
    %v432 = vld [vmem:[%s424 + $0x38] sm:$0xff]
    %v434 = vsel %vm105, %v420, 0
    %v437 = vsel %vm105, %v421, 0
    %v440 = vsel %vm105, %v422, 0
    %v443 = vsel %vm105, %v423, 0
    %445 = vmatprep.subr.mxu0 0.0
    %446 = vmatpush1.msra.mxu0 0.0
    %447 = vmatprep.subr.mxu0 0.0
    %448 = vmatpush1.msra.mxu0 0.0
    %449 = vmatprep.subr.mxu0 0.0
    %450 = vmatpush1.msra.mxu0 0.0
    %451 = vmatprep.subr.mxu0 0.0
    %452 = vmatpush1.msra.mxu0 0.0
    %453 = vmatprep.subr.mxu0 0.0
    %454 = vmatpush1.msra.mxu0 0.0
    %455 = vmatprep.subr.mxu0 0.0
    %456 = vmatpush1.msra.mxu0 0.0
    %457 = vmatprep.subr.mxu0 0.0
    %458 = vmatpush1.msra.mxu0 0.0
    %459 = vmatprep.subr.mxu0 0.0
    %460 = vmatpush1.msra.mxu0 0.0
    %461 = vmatprep.subr.mxu0 0.0
    %462 = vmatpush1.msra.mxu0 0.0
    %463 = vmatprep.subr.mxu0 0.0
    %464 = vmatpush1.msra.mxu0 0.0
    %465 = vmatprep.subr.mxu0 0.0
    %466 = vmatpush1.msra.mxu0 0.0
    %467 = vmatprep.subr.mxu0 0.0
    %468 = vmatpush1.msra.mxu0 0.0
    %469 = vmatprep.subr.mxu0 %v432
    %470 = vmatpush1.msra.mxu0 %v431
    %471 = vmatprep.subr.mxu0 %v430
    %472 = vmatpush1.msra.mxu0 %v429
    %473 = vmatprep.subr.mxu0 %v428
    %474 = vmatpush1.msra.mxu0 %v427
    %475 = vmatprep.subr.mxu0 %v426
    %476 = vmatpush1.msra.mxu0 %v425
    %477 = vmatprep.subr.mxu0 0.0
    %478 = vmatpush2.msra.mxu0 0.0
    %479 = vmatprep.subr.mxu0 0.0
    %480 = vmatpush2.msra.mxu0 0.0
    %481 = vmatprep.subr.mxu0 0.0
    %482 = vmatpush2.msra.mxu0 0.0
    %483 = vmatprep.subr.mxu0 0.0
    %484 = vmatpush2.msra.mxu0 0.0
    %485 = vmatprep.subr.mxu0 0.0
    %486 = vmatpush2.msra.mxu0 0.0
    %487 = vmatprep.subr.mxu0 0.0
    %488 = vmatpush2.msra.mxu0 0.0
    %489 = vmatprep.subr.mxu0 0.0
    %490 = vmatpush2.msra.mxu0 0.0
    %491 = vmatprep.subr.mxu0 0.0
    %492 = vmatpush2.msra.mxu0 0.0
    %493 = vmatprep.subr.mxu0 0.0
    %494 = vmatpush2.msra.mxu0 0.0
    %495 = vmatprep.subr.mxu0 0.0
    %496 = vmatpush2.msra.mxu0 0.0
    %497 = vmatprep.subr.mxu0 0.0
    %498 = vmatpush2.msra.mxu0 0.0
    %499 = vmatprep.subr.mxu0 0.0
    %500 = vmatpush2.msra.mxu0 0.0
    %501 = vmatprep.subr.mxu0 0.0
    %502 = vmatpush2.msra.mxu0 0.0
    %503 = vmatprep.subr.mxu0 0.0
    %504 = vmatpush2.msra.mxu0 0.0
    %505 = vmatprep.subr.mxu0 0.0
    %506 = vmatpush2.msra.mxu0 0.0
    %507 = vmatprep.subr.mxu0 0.0
    %508 = vmatpush2.msra.mxu0 0.0
    %509 = vmatprep.mubr.f32.mxu0 0.0
    %510 = vmatmul.mubr.f32.gmra.mxu0 %v434
    %v511 = vpop.f32.mrf.mxu0
    %v512 = vadd.f32 0.0, %v511
    %v513 = vpop.f32.mrf.mxu0
    %v514 = vadd.f32 0.0, %v513
    %515 = vmatprep.mubr.f32.mxu0 0.0
    %516 = vmatmul.mubr.f32.gmra.mxu0 %v437
    %v517 = vpop.f32.mrf.mxu0
    %v518 = vadd.f32 0.0, %v517
    %v519 = vpop.f32.mrf.mxu0
    %v520 = vadd.f32 0.0, %v519
    %521 = vmatprep.mubr.f32.mxu0 0.0
    %522 = vmatmul.mubr.f32.gmra.mxu0 %v440
    %v523 = vpop.f32.mrf.mxu0
    %v524 = vadd.f32 0.0, %v523
    %v525 = vpop.f32.mrf.mxu0
    %v526 = vadd.f32 0.0, %v525
    %527 = vmatprep.mubr.f32.mxu0 0.0
    %528 = vmatmul.mubr.f32.gmra.mxu0 %v443
    %v529 = vpop.f32.mrf.mxu0
    %v530 = vadd.f32 0.0, %v529
    %v531 = vpop.f32.mrf.mxu0
    %v532 = vadd.f32 0.0, %v531
    %533 = vdwg.mxu0
    %534 = vst [vmem:[#allocation2] sm:$0xff] %v512
    %535 = vst [vmem:[#allocation2 + $0x8] sm:$0xff] %v514
    %536 = vst [vmem:[#allocation2 + $0x10] sm:$0xff] %v518
    %537 = vst [vmem:[#allocation2 + $0x18] sm:$0xff] %v520
    %538 = vst [vmem:[#allocation2 + $0x20] sm:$0xff] %v524
    %539 = vst [vmem:[#allocation2 + $0x28] sm:$0xff] %v526
    %540 = vst [vmem:[#allocation2 + $0x30] sm:$0xff] %v530
    %541 = vst [vmem:[#allocation2 + $0x38] sm:$0xff] %v532
    %v542 = vld [vmem:[#allocation2] sm:$0xff]
    %v543 = vld [vmem:[#allocation2 + $0x8] sm:$0xff]
    %v544 = vld [vmem:[#allocation2 + $0x10] sm:$0xff]
    %v545 = vld [vmem:[#allocation2 + $0x18] sm:$0xff]
    %v546 = vld [vmem:[#allocation2 + $0x20] sm:$0xff]
    %v547 = vld [vmem:[#allocation2 + $0x28] sm:$0xff]
    %v548 = vld [vmem:[#allocation2 + $0x30] sm:$0xff]
    %v549 = vld [vmem:[#allocation2 + $0x38] sm:$0xff]
    %v550 = vld [vmem:[#allocation9] sm:$0xff]
    %v551 = vld [vmem:[#allocation9 + $0x8] sm:$0xff]
    %v552 = vld [vmem:[#allocation9 + $0x10] sm:$0xff]
    %v553 = vld [vmem:[#allocation9 + $0x18] sm:$0xff]
    %s554 = scalar_lea.vmem [#allocation6], 64
    %v555 = vld [vmem:[%s554] sm:$0xff]
    %v556 = vld [vmem:[%s554 + $0x8] sm:$0xff]
    %v557 = vld [vmem:[%s554 + $0x10] sm:$0xff]
    %v558 = vld [vmem:[%s554 + $0x18] sm:$0xff]
    %v559 = vld [vmem:[%s554 + $0x20] sm:$0xff]
    %v560 = vld [vmem:[%s554 + $0x28] sm:$0xff]
    %v561 = vld [vmem:[%s554 + $0x30] sm:$0xff]
    %v562 = vld [vmem:[%s554 + $0x38] sm:$0xff]
    %v564 = vsel %vm105, %v550, 0
    %v567 = vsel %vm105, %v551, 0
    %v570 = vsel %vm105, %v552, 0
    %v573 = vsel %vm105, %v553, 0
    %575 = vmatprep.subr.mxu0 0.0
    %576 = vmatpush1.msra.mxu0 0.0
    %577 = vmatprep.subr.mxu0 0.0
    %578 = vmatpush1.msra.mxu0 0.0
    %579 = vmatprep.subr.mxu0 0.0
    %580 = vmatpush1.msra.mxu0 0.0
    %581 = vmatprep.subr.mxu0 0.0
    %582 = vmatpush1.msra.mxu0 0.0
    %583 = vmatprep.subr.mxu0 0.0
    %584 = vmatpush1.msra.mxu0 0.0
    %585 = vmatprep.subr.mxu0 0.0
    %586 = vmatpush1.msra.mxu0 0.0
    %587 = vmatprep.subr.mxu0 0.0
    %588 = vmatpush1.msra.mxu0 0.0
    %589 = vmatprep.subr.mxu0 0.0
    %590 = vmatpush1.msra.mxu0 0.0
    %591 = vmatprep.subr.mxu0 0.0
    %592 = vmatpush1.msra.mxu0 0.0
    %593 = vmatprep.subr.mxu0 0.0
    %594 = vmatpush1.msra.mxu0 0.0
    %595 = vmatprep.subr.mxu0 0.0
    %596 = vmatpush1.msra.mxu0 0.0
    %597 = vmatprep.subr.mxu0 0.0
    %598 = vmatpush1.msra.mxu0 0.0
    %599 = vmatprep.subr.mxu0 %v562
    %600 = vmatpush1.msra.mxu0 %v561
    %601 = vmatprep.subr.mxu0 %v560
    %602 = vmatpush1.msra.mxu0 %v559
    %603 = vmatprep.subr.mxu0 %v558
    %604 = vmatpush1.msra.mxu0 %v557
    %605 = vmatprep.subr.mxu0 %v556
    %606 = vmatpush1.msra.mxu0 %v555
    %607 = vmatprep.subr.mxu0 0.0
    %608 = vmatpush2.msra.mxu0 0.0
    %609 = vmatprep.subr.mxu0 0.0
    %610 = vmatpush2.msra.mxu0 0.0
    %611 = vmatprep.subr.mxu0 0.0
    %612 = vmatpush2.msra.mxu0 0.0
    %613 = vmatprep.subr.mxu0 0.0
    %614 = vmatpush2.msra.mxu0 0.0
    %615 = vmatprep.subr.mxu0 0.0
    %616 = vmatpush2.msra.mxu0 0.0
    %617 = vmatprep.subr.mxu0 0.0
    %618 = vmatpush2.msra.mxu0 0.0
    %619 = vmatprep.subr.mxu0 0.0
    %620 = vmatpush2.msra.mxu0 0.0
    %621 = vmatprep.subr.mxu0 0.0
    %622 = vmatpush2.msra.mxu0 0.0
    %623 = vmatprep.subr.mxu0 0.0
    %624 = vmatpush2.msra.mxu0 0.0
    %625 = vmatprep.subr.mxu0 0.0
    %626 = vmatpush2.msra.mxu0 0.0
    %627 = vmatprep.subr.mxu0 0.0
    %628 = vmatpush2.msra.mxu0 0.0
    %629 = vmatprep.subr.mxu0 0.0
    %630 = vmatpush2.msra.mxu0 0.0
    %631 = vmatprep.subr.mxu0 0.0
    %632 = vmatpush2.msra.mxu0 0.0
    %633 = vmatprep.subr.mxu0 0.0
    %634 = vmatpush2.msra.mxu0 0.0
    %635 = vmatprep.subr.mxu0 0.0
    %636 = vmatpush2.msra.mxu0 0.0
    %637 = vmatprep.subr.mxu0 0.0
    %638 = vmatpush2.msra.mxu0 0.0
    %639 = vmatprep.mubr.f32.mxu0 0.0
    %640 = vmatmul.mubr.f32.gmra.mxu0 %v564
    %v641 = vpop.f32.mrf.mxu0
    %v642 = vadd.f32 0.0, %v641
    %v643 = vpop.f32.mrf.mxu0
    %v644 = vadd.f32 0.0, %v643
    %645 = vmatprep.mubr.f32.mxu0 0.0
    %646 = vmatmul.mubr.f32.gmra.mxu0 %v567
    %v647 = vpop.f32.mrf.mxu0
    %v648 = vadd.f32 0.0, %v647
    %v649 = vpop.f32.mrf.mxu0
    %v650 = vadd.f32 0.0, %v649
    %651 = vmatprep.mubr.f32.mxu0 0.0
    %652 = vmatmul.mubr.f32.gmra.mxu0 %v570
    %v653 = vpop.f32.mrf.mxu0
    %v654 = vadd.f32 0.0, %v653
    %v655 = vpop.f32.mrf.mxu0
    %v656 = vadd.f32 0.0, %v655
    %657 = vmatprep.mubr.f32.mxu0 0.0
    %658 = vmatmul.mubr.f32.gmra.mxu0 %v573
    %v659 = vpop.f32.mrf.mxu0
    %v660 = vadd.f32 0.0, %v659
    %v661 = vpop.f32.mrf.mxu0
    %v662 = vadd.f32 0.0, %v661
    %663 = vdwg.mxu0
    %v664 = vadd.f32 %v542, %v642
    %v665 = vadd.f32 %v543, %v644
    %v666 = vadd.f32 %v544, %v648
    %v667 = vadd.f32 %v545, %v650
    %v668 = vadd.f32 %v546, %v654
    %v669 = vadd.f32 %v547, %v656
    %v670 = vadd.f32 %v548, %v660
    %v671 = vadd.f32 %v549, %v662
    %672 = vst [vmem:[#allocation2] sm:$0xff] %v664
    %673 = vst [vmem:[#allocation2 + $0x8] sm:$0xff] %v665
    %674 = vst [vmem:[#allocation2 + $0x10] sm:$0xff] %v666
    %675 = vst [vmem:[#allocation2 + $0x18] sm:$0xff] %v667
    %676 = vst [vmem:[#allocation2 + $0x20] sm:$0xff] %v668
    %677 = vst [vmem:[#allocation2 + $0x28] sm:$0xff] %v669
    %678 = vst [vmem:[#allocation2 + $0x30] sm:$0xff] %v670
    %679 = vst [vmem:[#allocation2 + $0x38] sm:$0xff] %v671
    %v680 = vld [vmem:[#allocation2] sm:$0xff]
    %v681 = vld [vmem:[#allocation2 + $0x8] sm:$0xff]
    %v682 = vld [vmem:[#allocation2 + $0x10] sm:$0xff]
    %v683 = vld [vmem:[#allocation2 + $0x18] sm:$0xff]
    %v684 = vld [vmem:[#allocation2 + $0x20] sm:$0xff]
    %v685 = vld [vmem:[#allocation2 + $0x28] sm:$0xff]
    %v686 = vld [vmem:[#allocation2 + $0x30] sm:$0xff]
    %v687 = vld [vmem:[#allocation2 + $0x38] sm:$0xff]
    %v688 = vadd.f32 %v680, %v363
    %v689 = vadd.f32 %v681, %v363
    %v690 = vadd.f32 %v682, %v368
    %v691 = vadd.f32 %v683, %v368
    %v692 = vadd.f32 %v684, %v373
    %v693 = vadd.f32 %v685, %v373
    %v694 = vadd.f32 %v686, %v378
    %v695 = vadd.f32 %v687, %v378
    %v696 = vld [vmem:[%s424] sm:$0xff]
    %v697 = vld [vmem:[%s424 + $0x8] sm:$0xff]
    %v698 = vld [vmem:[%s424 + $0x10] sm:$0xff]
    %v699 = vld [vmem:[%s424 + $0x18] sm:$0xff]
    %v700 = vld [vmem:[%s424 + $0x20] sm:$0xff]
    %v701 = vld [vmem:[%s424 + $0x28] sm:$0xff]
    %v702 = vld [vmem:[%s424 + $0x30] sm:$0xff]
    %v703 = vld [vmem:[%s424 + $0x38] sm:$0xff]
    %v704 = vadd.f32 %v688, %v696
    %v705 = vadd.f32 %v689, %v697
    %v706 = vadd.f32 %v690, %v698
    %v707 = vadd.f32 %v691, %v699
    %v708 = vadd.f32 %v692, %v700
    %v709 = vadd.f32 %v693, %v701
    %v710 = vadd.f32 %v694, %v702
    %v711 = vadd.f32 %v695, %v703
    %v712 = vmax.f32 %v704, 0.0
    %v713 = vmax.f32 %v705, 0.0
    %v714 = vmax.f32 %v706, 0.0
    %v715 = vmax.f32 %v707, 0.0
    %v716 = vmax.f32 %v708, 0.0
    %v717 = vmax.f32 %v709, 0.0
    %v718 = vmax.f32 %v710, 0.0
    %v719 = vmax.f32 %v711, 0.0
    %s720 = scalar_lea.vmem [#allocation12], 64
    %721 = vst [vmem:[%s720] sm:$0xff] %v712
    %722 = vst [vmem:[%s720 + $0x8] sm:$0xff] %v713
    %723 = vst [vmem:[%s720 + $0x10] sm:$0xff] %v714
    %724 = vst [vmem:[%s720 + $0x18] sm:$0xff] %v715
    %725 = vst [vmem:[%s720 + $0x20] sm:$0xff] %v716
    %726 = vst [vmem:[%s720 + $0x28] sm:$0xff] %v717
    %727 = vst [vmem:[%s720 + $0x30] sm:$0xff] %v718
    %728 = vst [vmem:[%s720 + $0x38] sm:$0xff] %v719
    // Predicated region
    $region42: #{tpu_custom_call.1} parent=1 // pred_check
      _
    $region43: #{tpu_custom_call.1} parent=1 // pred_check_branch
      %730 = sbr.rel (0) target = $region45
    $region44: #{tpu_custom_call.1} parent=1 // pred_region
      %s732 = ssub.s32 2048, 2048
      %733 = vsyncadd [#allocation5], %s732
      %s734 = sshll.u32 [#allocation12], 4
      %s735 = int_to_ptr.vmem [resolvable:$true] %s734
      %740 = dma.vmem_to_hbm [thread:$0]  %s735, 2048, %s5, [#allocation5], 256, 256, 16
    $region45: #{tpu_custom_call.1} parent=1 // pred_fallthru
      _
    // Predicated region
    $region46: #{tpu_custom_call.1} parent=1 // pred_check
      _
    $region47: #{tpu_custom_call.1} parent=1 // pred_check_branch
      %742 = sbr.rel (0) target = $region49
    $region48: #{tpu_custom_call.1} parent=1 // pred_region
      %743 = dma.done [#allocation5], 2048
    $region49: #{tpu_custom_call.1} parent=1 // pred_fallthru
      _
    %744 = vsyncpa [#allocation4], 1
    %745 = vsyncpa [#allocation7], 1
    %746 = vsyncpa [#allocation10], 1
    %747 = vsyncpa [#allocation5], 1

</llo_original>
